<compile_context>
chip_gen: v6e
topology: v6e:2x2x1
jax: 0.10.0
libtpu: 0.0.40
codegen_flags: <defaults>
</compile_context>

<pallas_src>
import functools

import jax
import jax.numpy as jnp
from jax import lax
from jax.experimental import pallas as pl
from jax.experimental.pallas import tpu as pltpu


# ----------------------------------------------------------------------------
# Feature probe: does this jax build accept pipeline_mode=pl.Buffered(1) on a
# pallas_call BlockSpec?  (Eager, tiny, runs once at import.)
# ----------------------------------------------------------------------------
def _probe_buffered_constants():
    try:
        def _probe(x_ref, o_ref):
            o_ref[...] = x_ref[...]

        spec = pl.BlockSpec((8, 128), lambda i: (0, 0),
                            pipeline_mode=pl.Buffered(1))
        out = pl.pallas_call(
            _probe,
            out_shape=jax.ShapeDtypeStruct((8, 128), jnp.float32),
            grid=(2,),
            in_specs=[spec],
            out_specs=pl.BlockSpec((8, 128), lambda i: (0, 0)),
        )(jnp.zeros((8, 128), jnp.float32))
        jax.block_until_ready(out)
        return True
    except Exception:
        return False


_BUFFERED_CONSTANTS = _probe_buffered_constants()


# ----------------------------------------------------------------------------
# Kernel: 4-layer MLP (Linear + folded-BN(+dequant) + ReLU) x3 -> Linear ->
# Sigmoid, emitting a lane-dense (1, tile_n) score row per grid step.
# ----------------------------------------------------------------------------
def _mlp_kernel(x_ref,
                w1_ref, s1_ref, b1_ref,
                w2_ref, s2_ref, b2_ref,
                w3_ref, s3_ref, b3_ref,
                w4_ref, b4_ref,
                o_ref):
    # bf16 matmuls with f32 accumulation; scale/shift, sigmoid in f32.
    x = x_ref[...].astype(jnp.bfloat16)                              # [tile_n, D]

    # int8 weights -> bf16 (exact for |v| <= 127); dequant scale is folded
    # into s1/s2/s3 together with the eval-mode BN scale.
    h = jnp.dot(x, w1_ref[...].astype(jnp.bfloat16),
                preferred_element_type=jnp.float32)
    h = jnp.maximum(h * s1_ref[...] + b1_ref[...], 0.0).astype(jnp.bfloat16)

    h = jnp.dot(h, w2_ref[...].astype(jnp.bfloat16),
                preferred_element_type=jnp.float32)
    h = jnp.maximum(h * s2_ref[...] + b2_ref[...], 0.0).astype(jnp.bfloat16)

    h = jnp.dot(h, w3_ref[...].astype(jnp.bfloat16),
                preferred_element_type=jnp.float32)
    h = jnp.maximum(h * s3_ref[...] + b3_ref[...], 0.0).astype(jnp.bfloat16)   # [tile_n, 64]

    # Final 64 -> 1 as an NT matmul: [1, 64] x [tile_n, 64]^T -> [1, tile_n].
    # Lane-dense score row directly (no lane-width-1 masked store).
    s_pre = lax.dot_general(
        w4_ref[...], h,
        dimension_numbers=(((1,), (1,)), ((), ())),
        preferred_element_type=jnp.float32)                          # [1, tile_n]
    o_ref[...] = jax.nn.sigmoid(s_pre + b4_ref[0, 0])                # b4 scalar (SMEM)


def _const_spec(arr):
    """Full-array block, constant index map (grid-invariant operand).

    Single-buffered (pl.Buffered(1)) when supported: the data never changes
    across grid steps, so double-buffering only wastes VMEM and a prologue
    prefetch."""
    n = arr.ndim

    def idx(i):
        return (0,) * n

    if _BUFFERED_CONSTANTS:
        return pl.BlockSpec(arr.shape, idx, pipeline_mode=pl.Buffered(1))
    return pl.BlockSpec(arr.shape, idx)


def _pick_tile_n(n_rows, cap=512):
    """Largest divisor of N in {512, 256, 128}; else one full tile (legal).

    VMEM budget (worst case, cap=512): x double buffer 2*512*2048*4 B = 8 MiB
    + int8 weights ~1.2 MiB (x1 with Buffered(1)) + small scales/shifts/out,
    comfortably under the 32 MiB scoped limit on v5e/v6e/v7x."""
    for t in (512, 256, 128):
        if t <= cap and n_rows >= t and n_rows % t == 0:
            return t
    return n_rows


def mlp_score(x, params, *, tile_n=None):
    """x: [N, D] (f32 or bf16) -> [1, N] f32 sigmoid scores (lane-dense row)."""
    N, D = x.shape
    if tile_n is None:
        tile_n = _pick_tile_n(N)
    assert N % tile_n == 0, "N must be a multiple of tile_n"
    grid = N // tile_n

    (w1, s1, b1, w2, s2, b2, w3, s3, b3, w4, b4) = params

    flops = int(2 * N * (D * 512 + 512 * 256 + 256 * 64 + 64))
    bytes_accessed = int(
        x.size * x.dtype.itemsize
        + sum(int(p.size) * p.dtype.itemsize for p in params)
        + N * 4)

    # Megacore gating: sharding the row axis across v7x's two TensorCores
    # duplicates the constant-weight DMA into each core, a net loss while the
    # kernel is weight-DMA bound (small N).  Only go parallel when x traffic
    # dominates weight traffic.
    dim_sem = ("parallel",) if N >= 512 else ("arbitrary",)

    return pl.pallas_call(
        _mlp_kernel,
        out_shape=jax.ShapeDtypeStruct((1, N), jnp.float32),
        grid=(grid,),
        in_specs=[
            pl.BlockSpec((tile_n, D), lambda i: (i, 0)),          # x row tile
            _const_spec(w1), _const_spec(s1), _const_spec(b1),
            _const_spec(w2), _const_spec(s2), _const_spec(b2),
            _const_spec(w3), _const_spec(s3), _const_spec(b3),
            _const_spec(w4),
            pl.BlockSpec(memory_space=pltpu.MemorySpace.SMEM),    # b4 scalar
        ],
        out_specs=pl.BlockSpec((1, tile_n), lambda i: (0, i)),    # lane-dense row
        compiler_params=pltpu.CompilerParams(
            dimension_semantics=dim_sem,
            vmem_limit_bytes=32 * 1024 * 1024),
        cost_estimate=pl.CostEstimate(
            flops=flops, transcendentals=N, bytes_accessed=bytes_accessed),
    )(x, w1, s1, b1, w2, s2, b2, w3, s3, b3, w4, b4)


# ----------------------------------------------------------------------------
# Parameters: raw f32 Linear + eval-mode BN stats, then folded/quantized for
# the kernel (int8 per-output-channel weights, scale folded into BN scale).
# ----------------------------------------------------------------------------
_DIMS = [(None, 512), (512, 256), (256, 64), (64, 1)]  # inp_len filled at call


def make_raw_params(key, inp_len=2048):
    dims = [(inp_len, 512), (512, 256), (256, 64), (64, 1)]
    layers = []
    for li, (din, dout) in enumerate(dims):
        key, kw, kb, kg, kbe, krm, krv = jax.random.split(key, 7)
        bound = din ** -0.5
        w = jax.random.uniform(kw, (din, dout), jnp.float32, -bound, bound)
        b = jax.random.uniform(kb, (1, dout), jnp.float32, -bound, bound)
        if li < 3:
            gamma = jax.random.uniform(kg, (1, dout), jnp.float32, 0.8, 1.2)
            beta = jax.random.uniform(kbe, (1, dout), jnp.float32, -0.1, 0.1)
            rm = jax.random.uniform(krm, (1, dout), jnp.float32, -0.1, 0.1)
            rv = jax.random.uniform(krv, (1, dout), jnp.float32, 0.5, 1.5)
        else:
            gamma = beta = rm = rv = None
        layers.append(dict(w=w, b=b, gamma=gamma, beta=beta, mean=rm, var=rv))
    return layers


def _quantize_per_channel_int8(w):
    amax = jnp.max(jnp.abs(w), axis=0, keepdims=True)         # [1, dout]
    qs = jnp.where(amax > 0, amax / 127.0, 1.0)
    wq = jnp.clip(jnp.round(w / qs), -127, 127).astype(jnp.int8)
    return wq, qs


def fold_params(layers, quantize_int8=True):
    """Fold Linear bias + eval-mode BN (+ int8 dequant) into (scale, shift)."""
    eps = 1e-5
    params = []
    for li, lyr in enumerate(layers):
        w, b = lyr["w"], lyr["b"]
        if li < 3:
            bn_scale = lyr["gamma"] / jnp.sqrt(lyr["var"] + eps)
            shift = lyr["beta"] - lyr["mean"] * bn_scale + b * bn_scale
            if quantize_int8:
                wq, qs = _quantize_per_channel_int8(w)
                params += [wq, (bn_scale * qs).astype(jnp.float32),
                           shift.astype(jnp.float32)]
            else:
                params += [w.astype(jnp.bfloat16), bn_scale.astype(jnp.float32),
                           shift.astype(jnp.float32)]
        else:
            # Last layer (64 -> 1, no BN): tiny bf16 [1, 64] row for the NT
            # dot, scalar bias kept f32 (goes to SMEM).
            params += [w.T.astype(jnp.bfloat16),
                       b.reshape(1, 1).astype(jnp.float32)]
    return tuple(params)


# ----------------------------------------------------------------------------
# weight_score forward: one Pallas kernel + tiny fused-jnp weighted mean.
# Contract: fea_vector rows are batch-major [b0p0..b0pP-1, b1p0..] so the
# (1, N) score row reshapes to (B, P).  No epsilon on the denominator
# (matches PyTorch: all-zero patch weights divide by zero).
# ----------------------------------------------------------------------------
@functools.partial(jax.jit, static_argnames=("batch_size", "patch_number"))
def weight_score_forward(fea_vector, weight, params, *, batch_size, patch_number):
    score = mlp_score(fea_vector, params)                     # [1, B*P]
    score = score.reshape(batch_size, patch_number)
    w = weight.reshape(batch_size, patch_number).astype(jnp.float32)
    num = jnp.sum(score * w, axis=-1)
    den = jnp.sum(w, axis=-1)
    return (num / den).reshape(batch_size, 1)


# ----------------------------------------------------------------------------
# References: (a) same numeric path as the kernel (tight check), (b) pure f32
# PyTorch-equivalent path (loose check bounding bf16 + int8 error).
# ----------------------------------------------------------------------------
def reference_forward_matched(fea, weight, params, B, P):
    (w1, s1, b1, w2, s2, b2, w3, s3, b3, w4, b4) = params
    x = fea.astype(jnp.bfloat16)
    h = jnp.maximum(jnp.dot(x, w1.astype(jnp.bfloat16),
                            preferred_element_type=jnp.float32) * s1 + b1, 0.0)
    h = jnp.maximum(jnp.dot(h.astype(jnp.bfloat16), w2.astype(jnp.bfloat16),
                            preferred_element_type=jnp.float32) * s2 + b2, 0.0)
    h = jnp.maximum(jnp.dot(h.astype(jnp.bfloat16), w3.astype(jnp.bfloat16),
                            preferred_element_type=jnp.float32) * s3 + b3, 0.0)
    pre = jnp.dot(h.astype(jnp.bfloat16), w4.astype(jnp.bfloat16).T,
                  preferred_element_type=jnp.float32) + b4.reshape(1, 1)
    score = jax.nn.sigmoid(pre).reshape(B, P)
    w = weight.reshape(B, P).astype(jnp.float32)
    return (jnp.sum(score * w, -1) / jnp.sum(w, -1)).reshape(B, 1)


def reference_forward_f32(fea, weight, layers, B, P):
    eps = 1e-5
    h = fea
    for li, lyr in enumerate(layers):
        h = h @ lyr["w"] + lyr["b"]
        if li < 3:
            h = (h - lyr["mean"]) / jnp.sqrt(lyr["var"] + eps) * lyr["gamma"] \
                + lyr["beta"]
            h = jnp.maximum(h, 0.0)
    score = jax.nn.sigmoid(h).reshape(B, P)
    w = weight.reshape(B, P)
    return (jnp.sum(score * w, -1) / jnp.sum(w, -1)).reshape(B, 1)


if __name__ == "__main__":
    batch_size = 2
    patch_number = 8
    inp_len = 2048
    N = batch_size * patch_number

    key = jax.random.PRNGKey(0)
    k_par, k_x, k_w = jax.random.split(key, 3)

    raw_params = make_raw_params(k_par, inp_len)
    params = fold_params(raw_params, quantize_int8=True)

    fea_vector = jax.random.normal(k_x, (N, inp_len), jnp.float32)
    weight = jax.random.uniform(k_w, (batch_size, patch_number), jnp.float32,
                                0.1, 1.0)

    out = weight_score_forward(fea_vector, weight, params,
                               batch_size=batch_size,
                               patch_number=patch_number)
    out = jax.block_until_ready(out)
    assert out.shape == (batch_size, 1)

    # Tight check vs. the identical bf16/int8 compute path.
    ref_m = reference_forward_matched(fea_vector, weight, params,
                                      batch_size, patch_number)
    assert jnp.allclose(out, ref_m, atol=1e-3, rtol=1e-3), (out, ref_m)

    # Loose check vs. the pure-f32 PyTorch-equivalent path, bounding the
    # combined bf16-activation + int8-weight quantization error.
    ref_f = reference_forward_f32(fea_vector, weight, raw_params,
                                  batch_size, patch_number)
    assert jnp.allclose(out, ref_f, atol=5e-2), (out, ref_f)

    print("KERNEL_OK")
</pallas_src>

<mosaic_0001>
module attributes {stable_mosaic.version = 11 : i64} {
  func.func @_probe(%arg0: i32, %arg1: memref<8x128xf32, #tpu.memory_space<vmem>>, %arg2: memref<8x128xf32, #tpu.memory_space<vmem>>) attributes {dimension_semantics = [#tpu.dimension_semantics<arbitrary>], iteration_bounds = array<i64: 2>, scalar_prefetch = 0 : i64, scratch_operands = 0 : i64, tpu.core_type = #tpu.core_type<tc>, window_params = [{pipeline_mode = #tpu.pipeline_mode<synchronous>, transform_indices = @transform_0, window_bounds = array<i64: 8, 128>}, {pipeline_mode = #tpu.pipeline_mode<synchronous>, transform_indices = @transform_1, window_bounds = array<i64: 8, 128>}]} {
    %c0 = arith.constant 0 : index
    %c0_0 = arith.constant 0 : index
    %0 = vector.load %arg1[%c0, %c0_0] : memref<8x128xf32, #tpu.memory_space<vmem>>, vector<8x128xf32>
    %c0_1 = arith.constant 0 : index
    %c0_2 = arith.constant 0 : index
    %1 = vector.load %arg2[%c0_1, %c0_2] : memref<8x128xf32, #tpu.memory_space<vmem>>, vector<8x128xf32>
    tpu.vector_store %arg2[%c0_1, %c0_2], %0 {strides = array<i32>} : memref<8x128xf32, #tpu.memory_space<vmem>>, vector<8x128xf32>,
    return
  }
  func.func @transform_0(%arg0: i32) -> (i32, i32) {
    %c0_i32 = arith.constant 0 : i32
    %c0_i32_0 = arith.constant 0 : i32
    %c0_i32_1 = arith.constant 0 : i32
    return %c0_i32, %c0_i32_0 : i32, i32
  }
  func.func @transform_1(%arg0: i32) -> (i32, i32) {
    %c0_i32 = arith.constant 0 : i32
    %c0_i32_0 = arith.constant 0 : i32
    %c0_i32_1 = arith.constant 0 : i32
    return %c0_i32, %c0_i32_0 : i32, i32
  }
}

module attributes {stable_mosaic.version = 11 : i64} {
  func.func @_mlp_kernel(%arg0: i32, %arg1: memref<16x2048xf32, #tpu.memory_space<vmem>>, %arg2: memref<2048x512xi8, #tpu.memory_space<vmem>>, %arg3: memref<1x512xf32, #tpu.memory_space<vmem>>, %arg4: memref<1x512xf32, #tpu.memory_space<vmem>>, %arg5: memref<512x256xi8, #tpu.memory_space<vmem>>, %arg6: memref<1x256xf32, #tpu.memory_space<vmem>>, %arg7: memref<1x256xf32, #tpu.memory_space<vmem>>, %arg8: memref<256x64xi8, #tpu.memory_space<vmem>>, %arg9: memref<1x64xf32, #tpu.memory_space<vmem>>, %arg10: memref<1x64xf32, #tpu.memory_space<vmem>>, %arg11: memref<1x64xbf16, #tpu.memory_space<vmem>>, %arg12: memref<1x1xf32, #tpu.memory_space<smem>>, %arg13: memref<1x16xf32, #tpu.memory_space<vmem>>) attributes {dimension_semantics = [#tpu.dimension_semantics<arbitrary>], iteration_bounds = array<i64: 1>, scalar_prefetch = 0 : i64, scratch_operands = 0 : i64, tpu.core_type = #tpu.core_type<tc>, window_params = [{transform_indices = @transform_0, window_bounds = array<i64: 16, 2048>}, {pipeline_mode = #tpu.pipeline_mode<synchronous>, transform_indices = @transform_1, window_bounds = array<i64: 2048, 512>}, {pipeline_mode = #tpu.pipeline_mode<synchronous>, transform_indices = @transform_2, window_bounds = array<i64: 1, 512>}, {pipeline_mode = #tpu.pipeline_mode<synchronous>, transform_indices = @transform_3, window_bounds = array<i64: 1, 512>}, {pipeline_mode = #tpu.pipeline_mode<synchronous>, transform_indices = @transform_4, window_bounds = array<i64: 512, 256>}, {pipeline_mode = #tpu.pipeline_mode<synchronous>, transform_indices = @transform_5, window_bounds = array<i64: 1, 256>}, {pipeline_mode = #tpu.pipeline_mode<synchronous>, transform_indices = @transform_6, window_bounds = array<i64: 1, 256>}, {pipeline_mode = #tpu.pipeline_mode<synchronous>, transform_indices = @transform_7, window_bounds = array<i64: 256, 64>}, {pipeline_mode = #tpu.pipeline_mode<synchronous>, transform_indices = @transform_8, window_bounds = array<i64: 1, 64>}, {pipeline_mode = #tpu.pipeline_mode<synchronous>, transform_indices = @transform_9, window_bounds = array<i64: 1, 64>}, {pipeline_mode = #tpu.pipeline_mode<synchronous>, transform_indices = @transform_10, window_bounds = array<i64: 1, 64>}, {transform_indices = @transform_11, window_bounds = array<i64: 1, 1>}, {transform_indices = @transform_12, window_bounds = array<i64: 1, 16>}]} {
    %c0 = arith.constant 0 : index
    %c0_0 = arith.constant 0 : index
    %0 = vector.load %arg1[%c0, %c0_0] : memref<16x2048xf32, #tpu.memory_space<vmem>>, vector<16x2048xf32>
    %1 = arith.truncf %0 : vector<16x2048xf32> to vector<16x2048xbf16>
    %c0_1 = arith.constant 0 : index
    %c0_2 = arith.constant 0 : index
    %2 = vector.load %arg2[%c0_1, %c0_2] : memref<2048x512xi8, #tpu.memory_space<vmem>>, vector<2048x512xi8>
    %3 = arith.sitofp %2 : vector<2048x512xi8> to vector<2048x512xbf16>
    %cst = arith.constant dense<0.000000e+00> : vector<16x512xf32>
    %4 = tpu.matmul %1, %3, %cst {dimension_numbers = #tpu.dot_dimension_numbers<[1], [0], [0], [1], [0, 0, 1, 1], [], []>} : vector<16x2048xbf16>, vector<2048x512xbf16>, vector<16x512xf32> -> vector<16x512xf32>
    %c0_3 = arith.constant 0 : index
    %c0_4 = arith.constant 0 : index
    %5 = vector.load %arg3[%c0_3, %c0_4] : memref<1x512xf32, #tpu.memory_space<vmem>>, vector<1x512xf32>
    %6 = vector.broadcast %5 : vector<1x512xf32> to vector<16x512xf32>
    %7 = arith.mulf %4, %6 : vector<16x512xf32>
    %c0_5 = arith.constant 0 : index
    %c0_6 = arith.constant 0 : index
    %8 = vector.load %arg4[%c0_5, %c0_6] : memref<1x512xf32, #tpu.memory_space<vmem>>, vector<1x512xf32>
    %9 = vector.broadcast %8 : vector<1x512xf32> to vector<16x512xf32>
    %10 = arith.addf %7, %9 : vector<16x512xf32>
    %cst_7 = arith.constant 0.000000e+00 : f32
    %11 = vector.broadcast %cst_7 : f32 to vector<16x512xf32>
    %12 = arith.maximumf %10, %11 : vector<16x512xf32>
    %13 = arith.truncf %12 : vector<16x512xf32> to vector<16x512xbf16>
    %c0_8 = arith.constant 0 : index
    %c0_9 = arith.constant 0 : index
    %14 = vector.load %arg5[%c0_8, %c0_9] : memref<512x256xi8, #tpu.memory_space<vmem>>, vector<512x256xi8>
    %15 = arith.sitofp %14 : vector<512x256xi8> to vector<512x256xbf16>
    %cst_10 = arith.constant dense<0.000000e+00> : vector<16x256xf32>
    %16 = tpu.matmul %13, %15, %cst_10 {dimension_numbers = #tpu.dot_dimension_numbers<[1], [0], [0], [1], [0, 0, 1, 1], [], []>} : vector<16x512xbf16>, vector<512x256xbf16>, vector<16x256xf32> -> vector<16x256xf32>
    %c0_11 = arith.constant 0 : index
    %c0_12 = arith.constant 0 : index
    %17 = vector.load %arg6[%c0_11, %c0_12] : memref<1x256xf32, #tpu.memory_space<vmem>>, vector<1x256xf32>
    %18 = vector.broadcast %17 : vector<1x256xf32> to vector<16x256xf32>
    %19 = arith.mulf %16, %18 : vector<16x256xf32>
    %c0_13 = arith.constant 0 : index
    %c0_14 = arith.constant 0 : index
    %20 = vector.load %arg7[%c0_13, %c0_14] : memref<1x256xf32, #tpu.memory_space<vmem>>, vector<1x256xf32>
    %21 = vector.broadcast %20 : vector<1x256xf32> to vector<16x256xf32>
    %22 = arith.addf %19, %21 : vector<16x256xf32>
    %cst_15 = arith.constant 0.000000e+00 : f32
    %23 = vector.broadcast %cst_15 : f32 to vector<16x256xf32>
    %24 = arith.maximumf %22, %23 : vector<16x256xf32>
    %25 = arith.truncf %24 : vector<16x256xf32> to vector<16x256xbf16>
    %c0_16 = arith.constant 0 : index
    %c0_17 = arith.constant 0 : index
    %26 = vector.load %arg8[%c0_16, %c0_17] : memref<256x64xi8, #tpu.memory_space<vmem>>, vector<256x64xi8>
    %27 = arith.sitofp %26 : vector<256x64xi8> to vector<256x64xbf16>
    %cst_18 = arith.constant dense<0.000000e+00> : vector<16x64xf32>
    %28 = tpu.matmul %25, %27, %cst_18 {dimension_numbers = #tpu.dot_dimension_numbers<[1], [0], [0], [1], [0, 0, 1, 1], [], []>} : vector<16x256xbf16>, vector<256x64xbf16>, vector<16x64xf32> -> vector<16x64xf32>
    %c0_19 = arith.constant 0 : index
    %c0_20 = arith.constant 0 : index
    %29 = vector.load %arg9[%c0_19, %c0_20] : memref<1x64xf32, #tpu.memory_space<vmem>>, vector<1x64xf32>
    %30 = vector.broadcast %29 : vector<1x64xf32> to vector<16x64xf32>
    %31 = arith.mulf %28, %30 : vector<16x64xf32>
    %c0_21 = arith.constant 0 : index
    %c0_22 = arith.constant 0 : index
    %32 = vector.load %arg10[%c0_21, %c0_22] : memref<1x64xf32, #tpu.memory_space<vmem>>, vector<1x64xf32>
    %33 = vector.broadcast %32 : vector<1x64xf32> to vector<16x64xf32>
    %34 = arith.addf %31, %33 : vector<16x64xf32>
    %cst_23 = arith.constant 0.000000e+00 : f32
    %35 = vector.broadcast %cst_23 : f32 to vector<16x64xf32>
    %36 = arith.maximumf %34, %35 : vector<16x64xf32>
    %37 = arith.truncf %36 : vector<16x64xf32> to vector<16x64xbf16>
    %c0_24 = arith.constant 0 : index
    %c0_25 = arith.constant 0 : index
    %38 = vector.load %arg11[%c0_24, %c0_25] : memref<1x64xbf16, #tpu.memory_space<vmem>>, vector<1x64xbf16>
    %cst_26 = arith.constant dense<0.000000e+00> : vector<1x16xf32>
    %39 = tpu.matmul %38, %37, %cst_26 {dimension_numbers = #tpu.dot_dimension_numbers<[1], [1], [0], [0], [0, 0, 1, 0], [], []>} : vector<1x64xbf16>, vector<16x64xbf16>, vector<1x16xf32> -> vector<1x16xf32>
    %c0_27 = arith.constant 0 : index
    %c0_28 = arith.constant 0 : index
    %40 = memref.load %arg12[%c0_27, %c0_28] : memref<1x1xf32, #tpu.memory_space<smem>>
    %41 = vector.broadcast %40 : f32 to vector<1x16xf32>
    %42 = arith.addf %39, %41 : vector<1x16xf32>
    %43 = arith.negf %42 : vector<1x16xf32>
    %44 = math.exp %43 : vector<1x16xf32>
    %cst_29 = arith.constant 1.000000e+00 : f32
    %45 = vector.broadcast %cst_29 : f32 to vector<1x16xf32>
    %46 = arith.addf %45, %44 : vector<1x16xf32>
    %47 = arith.divf %45, %46 : vector<1x16xf32>
    %c0_30 = arith.constant 0 : index
    %c0_31 = arith.constant 0 : index
    %48 = vector.load %arg13[%c0_30, %c0_31] : memref<1x16xf32, #tpu.memory_space<vmem>>, vector<1x16xf32>
    tpu.vector_store %arg13[%c0_30, %c0_31], %47 {strides = array<i32>} : memref<1x16xf32, #tpu.memory_space<vmem>>, vector<1x16xf32>,
    return
  }
  func.func @transform_0(%arg0: i32) -> (i32, i32) {
    %c0_i32 = arith.constant 0 : i32
    %c0_i32_0 = arith.constant 0 : i32
    return %arg0, %c0_i32 : i32, i32
  }
  func.func @transform_1(%arg0: i32) -> (i32, i32) {
    %c0_i32 = arith.constant 0 : i32
    %c0_i32_0 = arith.constant 0 : i32
    %c0_i32_1 = arith.constant 0 : i32
    return %c0_i32, %c0_i32_0 : i32, i32
  }
  func.func @transform_2(%arg0: i32) -> (i32, i32) {
    %c0_i32 = arith.constant 0 : i32
    %c0_i32_0 = arith.constant 0 : i32
    %c0_i32_1 = arith.constant 0 : i32
    return %c0_i32, %c0_i32_0 : i32, i32
  }
  func.func @transform_3(%arg0: i32) -> (i32, i32) {
    %c0_i32 = arith.constant 0 : i32
    %c0_i32_0 = arith.constant 0 : i32
    %c0_i32_1 = arith.constant 0 : i32
    return %c0_i32, %c0_i32_0 : i32, i32
  }
  func.func @transform_4(%arg0: i32) -> (i32, i32) {
    %c0_i32 = arith.constant 0 : i32
    %c0_i32_0 = arith.constant 0 : i32
    %c0_i32_1 = arith.constant 0 : i32
    return %c0_i32, %c0_i32_0 : i32, i32
  }
  func.func @transform_5(%arg0: i32) -> (i32, i32) {
    %c0_i32 = arith.constant 0 : i32
    %c0_i32_0 = arith.constant 0 : i32
    %c0_i32_1 = arith.constant 0 : i32
    return %c0_i32, %c0_i32_0 : i32, i32
  }
  func.func @transform_6(%arg0: i32) -> (i32, i32) {
    %c0_i32 = arith.constant 0 : i32
    %c0_i32_0 = arith.constant 0 : i32
    %c0_i32_1 = arith.constant 0 : i32
    return %c0_i32, %c0_i32_0 : i32, i32
  }
  func.func @transform_7(%arg0: i32) -> (i32, i32) {
    %c0_i32 = arith.constant 0 : i32
    %c0_i32_0 = arith.constant 0 : i32
    %c0_i32_1 = arith.constant 0 : i32
    return %c0_i32, %c0_i32_0 : i32, i32
  }
  func.func @transform_8(%arg0: i32) -> (i32, i32) {
    %c0_i32 = arith.constant 0 : i32
    %c0_i32_0 = arith.constant 0 : i32
    %c0_i32_1 = arith.constant 0 : i32
    return %c0_i32, %c0_i32_0 : i32, i32
  }
  func.func @transform_9(%arg0: i32) -> (i32, i32) {
    %c0_i32 = arith.constant 0 : i32
    %c0_i32_0 = arith.constant 0 : i32
    %c0_i32_1 = arith.constant 0 : i32
    return %c0_i32, %c0_i32_0 : i32, i32
  }
  func.func @transform_10(%arg0: i32) -> (i32, i32) {
    %c0_i32 = arith.constant 0 : i32
    %c0_i32_0 = arith.constant 0 : i32
    %c0_i32_1 = arith.constant 0 : i32
    return %c0_i32, %c0_i32_0 : i32, i32
  }
  func.func @transform_11(%arg0: i32) -> (i32, i32) {
    %c0_i32 = arith.constant 0 : i32
    %c0_i32_0 = arith.constant 0 : i32
    %c0_i32_1 = arith.constant 0 : i32
    return %c0_i32, %c0_i32_0 : i32, i32
  }
  func.func @transform_12(%arg0: i32) -> (i32, i32) {
    %c0_i32 = arith.constant 0 : i32
    %c0_i32_0 = arith.constant 0 : i32
    return %c0_i32, %arg0 : i32, i32
  }
}

</mosaic_0001>

<llo_original>
// kernel: tpu_custom_call.1
$region0: #{tpu_custom_call.1}
  #allocation0 [shape = 'u32[]', space=smem, size = 0x4, offset = 0x4, fixed_abs, tag = 'smem constant byte address 0x4 - core index']
  #allocation1 [shape = 'u32[144,128]{1,0:T(1,128)}', space=vmem, size = 0x12000, scoped, tag = 'internal scratch']
  %s0 = inlined_call_operand.hbm [shape: f32[8,128], index: 0, kind: input, shape index: {}]
  %s1 = inlined_call_operand.hbm [shape: f32[8,128], index: 1, kind: output, shape index: {}]
  %s2 = sld [smem:[#allocation0]]
  $region41: #{tpu_custom_call.1} parent=0
    _
  %s4 = ssub.s32 1, %s2
  %s5 = scalar_select 0, %s4, %s2
  $region1: #{tpu_custom_call.1} parent=0
    #allocation2 [shape = 'u8[4096]{0}', space=vmem, size = 0x1000, scoped, tag = 'input window, operand 0, single buffered']
    #allocation3 [shape = 's32[2]{0}', space=sflag, size = 0x8, scoped, tag = 'scoped memory for tpu_custom_call.1']
    #allocation4 [shape = 's32[2]{0}', space=sflag, size = 0x8, scoped, tag = 'scoped memory for tpu_custom_call.1']
    #allocation5 [shape = 'u8[4096]{0}', space=vmem, size = 0x1000, scoped, tag = 'output window, operand 0, single buffered']
    %6 = vsyncpa [#allocation3], 0
    %7 = vsyncpa [#allocation4], 0
    loop: start=0, step=1, limit=4
    $region2: #{tpu_custom_call.1} parent=1 // loop_pre_header
      _
    $region3: #{tpu_custom_call.1} parent=1 // loop_header
      %s9 = sphi 0, %s13
      %p10 = scmp.ge.s32.totalorder %s9, 4
      %s17 = sphi 0, %s17
      %s19 = sphi 0, %s17
      %s20 = sphi 0, %s19
      %s34 = sphi 0, %s20
      %s38 = sphi 0, %s38
      %s40 = sphi 0, %s38
      %s41 = sphi 0, %s40
      %s55 = sphi 0, %s41
    $region4: #{tpu_custom_call.1} parent=1 // loop_header_branch
      %12 = sbr.rel (%p10) target = $region8
    $region5: #{tpu_custom_call.1} parent=1 // loop_body
      %s14 = ssub.s32 %s9, 1
      %s15 = ssub.s32 %s9, 2
      %s16 = sadd.s32 %s9, 1
      %s18 = sadd.s32 %s17, 1
      %p21 = scmp.eq.s32.totalorder %s9, 1
      %p22 = scmp.ne.s32.totalorder %s17, %s19
      %p23 = scmp.eq.s32.totalorder %s9, 0
      %p24 = por %p22, %p23
      %p25 = scmp.ne.s32.totalorder %s17, %s19
      %p26 = scmp.eq.s32.totalorder %s14, 1
      %p27 = por %p25, %p26
      %p28 = scmp.ne.s32.totalorder %s19, %s20
      %p29 = scmp.eq.s32.totalorder %s14, 0
      %p30 = por %p28, %p29
      %p31 = scmp.ne.s32.totalorder %s19, %s20
      %p32 = scmp.eq.s32.totalorder %s15, 1
      %p33 = por %p31, %p32
      %p35 = scmp.ne.s32.totalorder %s20, %s34
      %p36 = scmp.eq.s32.totalorder %s15, 0
      %p37 = por %p35, %p36
      %s39 = sadd.s32 %s38, 1
      %p42 = scmp.eq.s32.totalorder %s9, 1
      %p43 = scmp.ne.s32.totalorder %s38, %s40
      %p44 = scmp.eq.s32.totalorder %s9, 0
      %p45 = por %p43, %p44
      %p46 = scmp.ne.s32.totalorder %s38, %s40
      %p47 = scmp.eq.s32.totalorder %s14, 1
      %p48 = por %p46, %p47
      %p49 = scmp.ne.s32.totalorder %s40, %s41
      %p50 = scmp.eq.s32.totalorder %s14, 0
      %p51 = por %p49, %p50
      %p52 = scmp.ne.s32.totalorder %s40, %s41
      %p53 = scmp.eq.s32.totalorder %s15, 1
      %p54 = por %p52, %p53
      %p56 = scmp.ne.s32.totalorder %s41, %s55
      %p57 = scmp.eq.s32.totalorder %s15, 0
      %p58 = por %p56, %p57
      %p59 = scmp.le.s32.totalorder 1, %s9
      %p60 = scmp.lt.s32.totalorder %s9, 3
      %p61 = pnand %p59, %p60
      %p62 = pneg %p61
      // Predicated region
      $region9: #{tpu_custom_call.1} parent=5 // pred_check
        _
      $region10: #{tpu_custom_call.1} parent=5 // pred_check_branch
        %64 = sbr.rel (%p61) target = $region12
      $region11: #{tpu_custom_call.1} parent=5 // pred_region
        %s65 = ssub.s32 %s9, 1
        // Predicated region
        $region13: #{tpu_custom_call.1} parent=11 // pred_check
          %p66 = pneg %p30
        $region14: #{tpu_custom_call.1} parent=11 // pred_check_branch
          %68 = sbr.rel (%p66) target = $region16
        $region15: #{tpu_custom_call.1} parent=11 // pred_region
          %s70 = ssub.s32 128, 128
          %71 = vsyncadd [#allocation3], %s70
          %s73 = sshll.u32 [#allocation2], 4
          %s74 = int_to_ptr.vmem [resolvable:$true] %s73
          %76 = dma.hbm_to_vmem [thread:$0]  %s0, 128, %s74, [#allocation3]
        $region16: #{tpu_custom_call.1} parent=11 // pred_fallthru
          _
      $region12: #{tpu_custom_call.1} parent=5 // pred_fallthru
        _
      %p77 = scmp.lt.s32.totalorder %s9, 2
      // Predicated region
      $region17: #{tpu_custom_call.1} parent=5 // pred_check
        %p78 = pneg %p77
      $region18: #{tpu_custom_call.1} parent=5 // pred_check_branch
        %80 = sbr.rel (%p78) target = $region20
      $region19: #{tpu_custom_call.1} parent=5 // pred_region
        _
      $region20: #{tpu_custom_call.1} parent=5 // pred_fallthru
        _
      %p81 = scmp.le.s32.totalorder 1, %s9
      %p82 = scmp.lt.s32.totalorder %s9, 3
      %p83 = pnand %p81, %p82
      %p84 = pneg %p83
      // Predicated region
      $region21: #{tpu_custom_call.1} parent=5 // pred_check
        _
      $region22: #{tpu_custom_call.1} parent=5 // pred_check_branch
        %86 = sbr.rel (%p83) target = $region24
      $region23: #{tpu_custom_call.1} parent=5 // pred_region
        %s87 = ssub.s32 %s9, 1
        // Predicated region
        $region25: #{tpu_custom_call.1} parent=23 // pred_check
          %p88 = pneg %p30
        $region26: #{tpu_custom_call.1} parent=23 // pred_check_branch
          %90 = sbr.rel (%p88) target = $region28
        $region27: #{tpu_custom_call.1} parent=23 // pred_region
          %91 = dma.done [#allocation3], 128
        $region28: #{tpu_custom_call.1} parent=23 // pred_fallthru
          _
        %p92 = pneg %p30
        %p93 = pneg %p27
        %p94 = pneg %p51
        %p95 = pneg %p48
        %v96 = vld [vmem:[#allocation2] sm:$0xff]
        %97 = vst [vmem:[#allocation5] sm:$0xff] %v96
        // Predicated region
        $region29: #{tpu_custom_call.1} parent=23 // pred_check
          %p98 = pneg %p48
        $region30: #{tpu_custom_call.1} parent=23 // pred_check_branch
          %100 = sbr.rel (%p98) target = $region32
        $region31: #{tpu_custom_call.1} parent=23 // pred_region
          %s102 = ssub.s32 128, 128
          %103 = vsyncadd [#allocation4], %s102
          %s105 = sshll.u32 [#allocation5], 4
          %s106 = int_to_ptr.vmem [resolvable:$true] %s105
          %108 = dma.vmem_to_hbm [thread:$0]  %s106, 128, %s1, [#allocation4]
        $region32: #{tpu_custom_call.1} parent=23 // pred_fallthru
          _
        // Predicated region
        $region33: #{tpu_custom_call.1} parent=23 // pred_check
          %p109 = pneg %p48
        $region34: #{tpu_custom_call.1} parent=23 // pred_check_branch
          %111 = sbr.rel (%p109) target = $region36
        $region35: #{tpu_custom_call.1} parent=23 // pred_region
          %112 = dma.done [#allocation4], 128
        $region36: #{tpu_custom_call.1} parent=23 // pred_fallthru
          _
      $region24: #{tpu_custom_call.1} parent=5 // pred_fallthru
        _
      %p113 = scmp.le.s32.totalorder 2, %s9
      // Predicated region
      $region37: #{tpu_custom_call.1} parent=5 // pred_check
        %p114 = pneg %p113
      $region38: #{tpu_custom_call.1} parent=5 // pred_check_branch
        %116 = sbr.rel (%p114) target = $region40
      $region39: #{tpu_custom_call.1} parent=5 // pred_region
        %s117 = ssub.s32 %s9, 2
      $region40: #{tpu_custom_call.1} parent=5 // pred_fallthru
        _
    $region6: #{tpu_custom_call.1} parent=1 // loop_footer
      %s13 = sadd.s32 1, %s9
    $region7: #{tpu_custom_call.1} parent=1 // loop_footer_branch
      %8 = sbr.rel target = $region3
    $region8: #{tpu_custom_call.1} parent=1 // loop_exit
      _
    %118 = vsyncpa [#allocation3], 1
    %s119 = scalar_lea.sflag [#allocation3], 1
    %120 = vsyncpa %s119, 1
    %121 = vsyncpa [#allocation4], 1
    %s122 = scalar_lea.sflag [#allocation4], 1
    %123 = vsyncpa %s122, 1

// kernel: weight_score_forward.1
$region0: #{weight_score_forward.1}
  #allocation0 [shape = 'u32[]', space=smem, size = 0x4, offset = 0x4, fixed_abs, tag = 'smem constant byte address 0x4 - core index']
  #allocation1 [shape = 'u32[144,128]{1,0:T(1,128)}', space=vmem, size = 0x12000, scoped, tag = 'internal scratch']
  #allocation2 [shape = 'f32[1,1]{1,0:T(1,128)S(6)}', space=smem, size = 0x200, scoped, tag = 'scoped memory for weight_score_forward.1']
  %s0 = inlined_call_operand.hbm [shape: f32[16,2048], index: 0, kind: input, shape index: {}]
  %s1 = inlined_call_operand.hbm [shape: s8[2048,512], index: 1, kind: input, shape index: {}]
  %s2 = inlined_call_operand.vmem [shape: f32[1,512], index: 2, kind: input, shape index: {}]
  %s3 = inlined_call_operand.vmem [shape: f32[1,512], index: 3, kind: input, shape index: {}]
  %s4 = inlined_call_operand.hbm [shape: s8[512,256], index: 4, kind: input, shape index: {}]
  %s5 = inlined_call_operand.vmem [shape: f32[1,256], index: 5, kind: input, shape index: {}]
  %s6 = inlined_call_operand.vmem [shape: f32[1,256], index: 6, kind: input, shape index: {}]
  %s7 = inlined_call_operand.vmem [shape: s8[256,64], index: 7, kind: input, shape index: {}]
  %s8 = inlined_call_operand.vmem [shape: f32[1,64], index: 8, kind: input, shape index: {}]
  %s9 = inlined_call_operand.vmem [shape: f32[1,64], index: 9, kind: input, shape index: {}]
  %s10 = inlined_call_operand.vmem [shape: bf16[1,64], index: 10, kind: input, shape index: {}]
  %s11 = inlined_call_operand.<no memory space> [shape: f32[1,1], index: 11, kind: input, shape index: {}]
  %s12 = inlined_call_operand.vmem [shape: f32[1,16], index: 12, kind: output, shape index: {}]
  %s13 = sld [smem:[#allocation0]]
  $region70: #{weight_score_forward.1} parent=0
    _
  %s15 = ssub.s32 1, %s13
  %s16 = scalar_select 0, %s15, %s13
  %17 = sst [smem:[#allocation2]] %s11
  $region1: #{weight_score_forward.1} parent=0
    #allocation3 [shape = 'u8[131072]{0}', space=vmem, size = 0x20000, scoped, tag = 'input window, operand 0, single buffered']
    #allocation4 [shape = 's32[1]{0}', space=sflag, size = 0x4, scoped, tag = 'scoped memory for weight_score_forward.1']
    #allocation5 [shape = 'u8[1048576]{0}', space=vmem, size = 0x100000, scoped, tag = 'input window, operand 1, single buffered']
    #allocation6 [shape = 's32[1]{0}', space=sflag, size = 0x4, scoped, tag = 'scoped memory for weight_score_forward.1']
    #allocation7 [shape = 'u8[131072]{0}', space=vmem, size = 0x20000, scoped, tag = 'input window, operand 4, single buffered']
    %18 = vsyncpa [#allocation4], 0
    %19 = vsyncpa [#allocation6], 0
    // Predicated region
    $region2: #{weight_score_forward.1} parent=1 // pred_check
      _
    $region3: #{weight_score_forward.1} parent=1 // pred_check_branch
      %21 = sbr.rel (0) target = $region5
    $region4: #{weight_score_forward.1} parent=1 // pred_region
      %s23 = ssub.s32 4096, 4096
      %24 = vsyncadd [#allocation4], %s23
      %s25 = sshll.u32 [#allocation3], 4
      %s26 = int_to_ptr.vmem [resolvable:$true] %s25
      %31 = dma.hbm_to_vmem [thread:$0]  %s0, 4096, %s26, [#allocation4], 2048, 2048, 128
    $region5: #{weight_score_forward.1} parent=1 // pred_fallthru
      _
    // Predicated region
    $region6: #{weight_score_forward.1} parent=1 // pred_check
      _
    $region7: #{weight_score_forward.1} parent=1 // pred_check_branch
      %33 = sbr.rel (0) target = $region9
    $region8: #{weight_score_forward.1} parent=1 // pred_region
      %s35 = ssub.s32 32768, 32768
      %36 = vsyncadd [#allocation6], %s35
      %s37 = sshll.u32 [#allocation5], 4
      %s38 = int_to_ptr.vmem [resolvable:$true] %s37
      %43 = dma.hbm_to_vmem [thread:$0]  %s1, 32768, %s38, [#allocation6], 512, 512, 32
    $region9: #{weight_score_forward.1} parent=1 // pred_fallthru
      _
    // Predicated region
    $region10: #{weight_score_forward.1} parent=1 // pred_check
      _
    $region11: #{weight_score_forward.1} parent=1 // pred_check_branch
      %45 = sbr.rel (0) target = $region13
    $region12: #{weight_score_forward.1} parent=1 // pred_region
      _
    $region13: #{weight_score_forward.1} parent=1 // pred_fallthru
      _
    // Predicated region
    $region14: #{weight_score_forward.1} parent=1 // pred_check
      _
    $region15: #{weight_score_forward.1} parent=1 // pred_check_branch
      %47 = sbr.rel (0) target = $region17
    $region16: #{weight_score_forward.1} parent=1 // pred_region
      _
    $region17: #{weight_score_forward.1} parent=1 // pred_fallthru
      _
    // Predicated region
    $region18: #{weight_score_forward.1} parent=1 // pred_check
      _
    $region19: #{weight_score_forward.1} parent=1 // pred_check_branch
      %49 = sbr.rel (0) target = $region21
    $region20: #{weight_score_forward.1} parent=1 // pred_region
      %s51 = ssub.s32 4096, 4096
      %52 = vsyncadd [#allocation6], %s51
      %s53 = sshll.u32 [#allocation7], 4
      %s54 = int_to_ptr.vmem [resolvable:$true] %s53
      %59 = dma.hbm_to_vmem [thread:$0]  %s4, 4096, %s54, [#allocation6], 256, 256, 16
    $region21: #{weight_score_forward.1} parent=1 // pred_fallthru
      _
    // Predicated region
    $region22: #{weight_score_forward.1} parent=1 // pred_check
      _
    $region23: #{weight_score_forward.1} parent=1 // pred_check_branch
      %61 = sbr.rel (0) target = $region25
    $region24: #{weight_score_forward.1} parent=1 // pred_region
      _
    $region25: #{weight_score_forward.1} parent=1 // pred_fallthru
      _
    // Predicated region
    $region26: #{weight_score_forward.1} parent=1 // pred_check
      _
    $region27: #{weight_score_forward.1} parent=1 // pred_check_branch
      %63 = sbr.rel (0) target = $region29
    $region28: #{weight_score_forward.1} parent=1 // pred_region
      _
    $region29: #{weight_score_forward.1} parent=1 // pred_fallthru
      _
    // Predicated region
    $region30: #{weight_score_forward.1} parent=1 // pred_check
      _
    $region31: #{weight_score_forward.1} parent=1 // pred_check_branch
      %65 = sbr.rel (0) target = $region33
    $region32: #{weight_score_forward.1} parent=1 // pred_region
      _
    $region33: #{weight_score_forward.1} parent=1 // pred_fallthru
      _
    // Predicated region
    $region34: #{weight_score_forward.1} parent=1 // pred_check
      _
    $region35: #{weight_score_forward.1} parent=1 // pred_check_branch
      %67 = sbr.rel (0) target = $region37
    $region36: #{weight_score_forward.1} parent=1 // pred_region
      _
    $region37: #{weight_score_forward.1} parent=1 // pred_fallthru
      _
    // Predicated region
    $region38: #{weight_score_forward.1} parent=1 // pred_check
      _
    $region39: #{weight_score_forward.1} parent=1 // pred_check_branch
      %69 = sbr.rel (0) target = $region41
    $region40: #{weight_score_forward.1} parent=1 // pred_region
      _
    $region41: #{weight_score_forward.1} parent=1 // pred_fallthru
      _
    // Predicated region
    $region42: #{weight_score_forward.1} parent=1 // pred_check
      _
    $region43: #{weight_score_forward.1} parent=1 // pred_check_branch
      %71 = sbr.rel (0) target = $region45
    $region44: #{weight_score_forward.1} parent=1 // pred_region
      _
    $region45: #{weight_score_forward.1} parent=1 // pred_fallthru
      _
    // Predicated region
    $region46: #{weight_score_forward.1} parent=1 // pred_check
      _
    $region47: #{weight_score_forward.1} parent=1 // pred_check_branch
      %73 = sbr.rel (0) target = $region49
    $region48: #{weight_score_forward.1} parent=1 // pred_region
      _
    $region49: #{weight_score_forward.1} parent=1 // pred_fallthru
      _
    // Predicated region
    $region50: #{weight_score_forward.1} parent=1 // pred_check
      _
    $region51: #{weight_score_forward.1} parent=1 // pred_check_branch
      %75 = sbr.rel (0) target = $region53
    $region52: #{weight_score_forward.1} parent=1 // pred_region
      %76 = dma.done [#allocation4], 4096
    $region53: #{weight_score_forward.1} parent=1 // pred_fallthru
      _
    // Predicated region
    $region54: #{weight_score_forward.1} parent=1 // pred_check
      _
    $region55: #{weight_score_forward.1} parent=1 // pred_check_branch
      %78 = sbr.rel (0) target = $region57
    $region56: #{weight_score_forward.1} parent=1 // pred_region
      %79 = dma.done [#allocation6], 32768
    $region57: #{weight_score_forward.1} parent=1 // pred_fallthru
      _
    // Predicated region
    $region58: #{weight_score_forward.1} parent=1 // pred_check
      _
    $region59: #{weight_score_forward.1} parent=1 // pred_check_branch
      %81 = sbr.rel (0) target = $region61
    $region60: #{weight_score_forward.1} parent=1 // pred_region
      %82 = dma.done [#allocation6], 4096
    $region61: #{weight_score_forward.1} parent=1 // pred_fallthru
      _
    %v84 = vld [vmem:[#allocation3] sm:$0xff]
    %v85 = vld [vmem:[#allocation3 + $0x8] sm:$0xff]
    %v86 = vld [vmem:[#allocation3 + $0x10] sm:$0xff]
    %v87 = vld [vmem:[#allocation3 + $0x18] sm:$0xff]
    %v88 = vld [vmem:[#allocation3 + $0x20] sm:$0xff]
    %v89 = vld [vmem:[#allocation3 + $0x28] sm:$0xff]
    %v90 = vld [vmem:[#allocation3 + $0x30] sm:$0xff]
    %v91 = vld [vmem:[#allocation3 + $0x38] sm:$0xff]
    %v92 = vld [vmem:[#allocation3 + $0x40] sm:$0xff]
    %v93 = vld [vmem:[#allocation3 + $0x48] sm:$0xff]
    %v94 = vld [vmem:[#allocation3 + $0x50] sm:$0xff]
    %v95 = vld [vmem:[#allocation3 + $0x58] sm:$0xff]
    %v96 = vld [vmem:[#allocation3 + $0x60] sm:$0xff]
    %v97 = vld [vmem:[#allocation3 + $0x68] sm:$0xff]
    %v98 = vld [vmem:[#allocation3 + $0x70] sm:$0xff]
    %v99 = vld [vmem:[#allocation3 + $0x78] sm:$0xff]
    %v100 = vld [vmem:[#allocation3 + $0x80] sm:$0xff]
    %v101 = vld [vmem:[#allocation3 + $0x88] sm:$0xff]
    %v102 = vld [vmem:[#allocation3 + $0x90] sm:$0xff]
    %v103 = vld [vmem:[#allocation3 + $0x98] sm:$0xff]
    %v104 = vld [vmem:[#allocation3 + $0xa0] sm:$0xff]
    %v105 = vld [vmem:[#allocation3 + $0xa8] sm:$0xff]
    %v106 = vld [vmem:[#allocation3 + $0xb0] sm:$0xff]
    %v107 = vld [vmem:[#allocation3 + $0xb8] sm:$0xff]
    %v108 = vld [vmem:[#allocation3 + $0xc0] sm:$0xff]
    %v109 = vld [vmem:[#allocation3 + $0xc8] sm:$0xff]
    %v110 = vld [vmem:[#allocation3 + $0xd0] sm:$0xff]
    %v111 = vld [vmem:[#allocation3 + $0xd8] sm:$0xff]
    %v112 = vld [vmem:[#allocation3 + $0xe0] sm:$0xff]
    %v113 = vld [vmem:[#allocation3 + $0xe8] sm:$0xff]
    %v114 = vld [vmem:[#allocation3 + $0xf0] sm:$0xff]
    %v115 = vld [vmem:[#allocation3 + $0xf8] sm:$0xff]
    %v116 = vpack.c.bf16 %v100, %v84
    %v117 = vpack.c.bf16 %v101, %v85
    %v118 = vpack.c.bf16 %v102, %v86
    %v119 = vpack.c.bf16 %v103, %v87
    %v120 = vpack.c.bf16 %v104, %v88
    %v121 = vpack.c.bf16 %v105, %v89
    %v122 = vpack.c.bf16 %v106, %v90
    %v123 = vpack.c.bf16 %v107, %v91
    %v124 = vpack.c.bf16 %v108, %v92
    %v125 = vpack.c.bf16 %v109, %v93
    %v126 = vpack.c.bf16 %v110, %v94
    %v127 = vpack.c.bf16 %v111, %v95
    %v128 = vpack.c.bf16 %v112, %v96
    %v129 = vpack.c.bf16 %v113, %v97
    %v130 = vpack.c.bf16 %v114, %v98
    %v131 = vpack.c.bf16 %v115, %v99
    %v132 = vld [vmem:[#allocation5] sm:$0xff]
    %v133 = vld [vmem:[#allocation5 + $0x8] sm:$0xff]
    %v134 = vld [vmem:[#allocation5 + $0x10] sm:$0xff]
    %v135 = vld [vmem:[#allocation5 + $0x18] sm:$0xff]
    %v136 = vld [vmem:[#allocation5 + $0x20] sm:$0xff]
    %v137 = vld [vmem:[#allocation5 + $0x28] sm:$0xff]
    %v138 = vld [vmem:[#allocation5 + $0x30] sm:$0xff]
    %v139 = vld [vmem:[#allocation5 + $0x38] sm:$0xff]
    %v140 = vld [vmem:[#allocation5 + $0x40] sm:$0xff]
    %v141 = vld [vmem:[#allocation5 + $0x48] sm:$0xff]
    %v142 = vld [vmem:[#allocation5 + $0x50] sm:$0xff]
    %v143 = vld [vmem:[#allocation5 + $0x58] sm:$0xff]
    %v144 = vld [vmem:[#allocation5 + $0x60] sm:$0xff]
    %v145 = vld [vmem:[#allocation5 + $0x68] sm:$0xff]
    %v146 = vld [vmem:[#allocation5 + $0x70] sm:$0xff]
    %v147 = vld [vmem:[#allocation5 + $0x78] sm:$0xff]
    %v148 = vld [vmem:[#allocation5 + $0x80] sm:$0xff]
    %v149 = vld [vmem:[#allocation5 + $0x88] sm:$0xff]
    %v150 = vld [vmem:[#allocation5 + $0x90] sm:$0xff]
    %v151 = vld [vmem:[#allocation5 + $0x98] sm:$0xff]
    %v152 = vld [vmem:[#allocation5 + $0xa0] sm:$0xff]
    %v153 = vld [vmem:[#allocation5 + $0xa8] sm:$0xff]
    %v154 = vld [vmem:[#allocation5 + $0xb0] sm:$0xff]
    %v155 = vld [vmem:[#allocation5 + $0xb8] sm:$0xff]
    %v156 = vld [vmem:[#allocation5 + $0xc0] sm:$0xff]
    %v157 = vld [vmem:[#allocation5 + $0xc8] sm:$0xff]
    %v158 = vld [vmem:[#allocation5 + $0xd0] sm:$0xff]
    %v159 = vld [vmem:[#allocation5 + $0xd8] sm:$0xff]
    %v160 = vld [vmem:[#allocation5 + $0xe0] sm:$0xff]
    %v161 = vld [vmem:[#allocation5 + $0xe8] sm:$0xff]
    %v162 = vld [vmem:[#allocation5 + $0xf0] sm:$0xff]
    %v163 = vld [vmem:[#allocation5 + $0xf8] sm:$0xff]
    %v164 = vld [vmem:[#allocation5 + $0x100] sm:$0xff]
    %v165 = vld [vmem:[#allocation5 + $0x108] sm:$0xff]
    %v166 = vld [vmem:[#allocation5 + $0x110] sm:$0xff]
    %v167 = vld [vmem:[#allocation5 + $0x118] sm:$0xff]
    %v168 = vld [vmem:[#allocation5 + $0x120] sm:$0xff]
    %v169 = vld [vmem:[#allocation5 + $0x128] sm:$0xff]
    %v170 = vld [vmem:[#allocation5 + $0x130] sm:$0xff]
    %v171 = vld [vmem:[#allocation5 + $0x138] sm:$0xff]
    %v172 = vld [vmem:[#allocation5 + $0x140] sm:$0xff]
    %v173 = vld [vmem:[#allocation5 + $0x148] sm:$0xff]
    %v174 = vld [vmem:[#allocation5 + $0x150] sm:$0xff]
    %v175 = vld [vmem:[#allocation5 + $0x158] sm:$0xff]
    %v176 = vld [vmem:[#allocation5 + $0x160] sm:$0xff]
    %v177 = vld [vmem:[#allocation5 + $0x168] sm:$0xff]
    %v178 = vld [vmem:[#allocation5 + $0x170] sm:$0xff]
    %v179 = vld [vmem:[#allocation5 + $0x178] sm:$0xff]
    %v180 = vld [vmem:[#allocation5 + $0x180] sm:$0xff]
    %v181 = vld [vmem:[#allocation5 + $0x188] sm:$0xff]
    %v182 = vld [vmem:[#allocation5 + $0x190] sm:$0xff]
    %v183 = vld [vmem:[#allocation5 + $0x198] sm:$0xff]
    %v184 = vld [vmem:[#allocation5 + $0x1a0] sm:$0xff]
    %v185 = vld [vmem:[#allocation5 + $0x1a8] sm:$0xff]
    %v186 = vld [vmem:[#allocation5 + $0x1b0] sm:$0xff]
    %v187 = vld [vmem:[#allocation5 + $0x1b8] sm:$0xff]
    %v188 = vld [vmem:[#allocation5 + $0x1c0] sm:$0xff]
    %v189 = vld [vmem:[#allocation5 + $0x1c8] sm:$0xff]
    %v190 = vld [vmem:[#allocation5 + $0x1d0] sm:$0xff]
    %v191 = vld [vmem:[#allocation5 + $0x1d8] sm:$0xff]
    %v192 = vld [vmem:[#allocation5 + $0x1e0] sm:$0xff]
    %v193 = vld [vmem:[#allocation5 + $0x1e8] sm:$0xff]
    %v194 = vld [vmem:[#allocation5 + $0x1f0] sm:$0xff]
    %v195 = vld [vmem:[#allocation5 + $0x1f8] sm:$0xff]
    %v196 = vld [vmem:[#allocation5 + $0x200] sm:$0xff]
    %v197 = vld [vmem:[#allocation5 + $0x208] sm:$0xff]
    %v198 = vld [vmem:[#allocation5 + $0x210] sm:$0xff]
    %v199 = vld [vmem:[#allocation5 + $0x218] sm:$0xff]
    %v200 = vld [vmem:[#allocation5 + $0x220] sm:$0xff]
    %v201 = vld [vmem:[#allocation5 + $0x228] sm:$0xff]
    %v202 = vld [vmem:[#allocation5 + $0x230] sm:$0xff]
    %v203 = vld [vmem:[#allocation5 + $0x238] sm:$0xff]
    %v204 = vld [vmem:[#allocation5 + $0x240] sm:$0xff]
    %v205 = vld [vmem:[#allocation5 + $0x248] sm:$0xff]
    %v206 = vld [vmem:[#allocation5 + $0x250] sm:$0xff]
    %v207 = vld [vmem:[#allocation5 + $0x258] sm:$0xff]
    %v208 = vld [vmem:[#allocation5 + $0x260] sm:$0xff]
    %v209 = vld [vmem:[#allocation5 + $0x268] sm:$0xff]
    %v210 = vld [vmem:[#allocation5 + $0x270] sm:$0xff]
    %v211 = vld [vmem:[#allocation5 + $0x278] sm:$0xff]
    %v212 = vld [vmem:[#allocation5 + $0x280] sm:$0xff]
    %v213 = vld [vmem:[#allocation5 + $0x288] sm:$0xff]
    %v214 = vld [vmem:[#allocation5 + $0x290] sm:$0xff]
    %v215 = vld [vmem:[#allocation5 + $0x298] sm:$0xff]
    %v216 = vld [vmem:[#allocation5 + $0x2a0] sm:$0xff]
    %v217 = vld [vmem:[#allocation5 + $0x2a8] sm:$0xff]
    %v218 = vld [vmem:[#allocation5 + $0x2b0] sm:$0xff]
    %v219 = vld [vmem:[#allocation5 + $0x2b8] sm:$0xff]
    %v220 = vld [vmem:[#allocation5 + $0x2c0] sm:$0xff]
    %v221 = vld [vmem:[#allocation5 + $0x2c8] sm:$0xff]
    %v222 = vld [vmem:[#allocation5 + $0x2d0] sm:$0xff]
    %v223 = vld [vmem:[#allocation5 + $0x2d8] sm:$0xff]
    %v224 = vld [vmem:[#allocation5 + $0x2e0] sm:$0xff]
    %v225 = vld [vmem:[#allocation5 + $0x2e8] sm:$0xff]
    %v226 = vld [vmem:[#allocation5 + $0x2f0] sm:$0xff]
    %v227 = vld [vmem:[#allocation5 + $0x2f8] sm:$0xff]
    %v228 = vld [vmem:[#allocation5 + $0x300] sm:$0xff]
    %v229 = vld [vmem:[#allocation5 + $0x308] sm:$0xff]
    %v230 = vld [vmem:[#allocation5 + $0x310] sm:$0xff]
    %v231 = vld [vmem:[#allocation5 + $0x318] sm:$0xff]
    %v232 = vld [vmem:[#allocation5 + $0x320] sm:$0xff]
    %v233 = vld [vmem:[#allocation5 + $0x328] sm:$0xff]
    %v234 = vld [vmem:[#allocation5 + $0x330] sm:$0xff]
    %v235 = vld [vmem:[#allocation5 + $0x338] sm:$0xff]
    %v236 = vld [vmem:[#allocation5 + $0x340] sm:$0xff]
    %v237 = vld [vmem:[#allocation5 + $0x348] sm:$0xff]
    %v238 = vld [vmem:[#allocation5 + $0x350] sm:$0xff]
    %v239 = vld [vmem:[#allocation5 + $0x358] sm:$0xff]
    %v240 = vld [vmem:[#allocation5 + $0x360] sm:$0xff]
    %v241 = vld [vmem:[#allocation5 + $0x368] sm:$0xff]
    %v242 = vld [vmem:[#allocation5 + $0x370] sm:$0xff]
    %v243 = vld [vmem:[#allocation5 + $0x378] sm:$0xff]
    %v244 = vld [vmem:[#allocation5 + $0x380] sm:$0xff]
    %v245 = vld [vmem:[#allocation5 + $0x388] sm:$0xff]
    %v246 = vld [vmem:[#allocation5 + $0x390] sm:$0xff]
    %v247 = vld [vmem:[#allocation5 + $0x398] sm:$0xff]
    %v248 = vld [vmem:[#allocation5 + $0x3a0] sm:$0xff]
    %v249 = vld [vmem:[#allocation5 + $0x3a8] sm:$0xff]
    %v250 = vld [vmem:[#allocation5 + $0x3b0] sm:$0xff]
    %v251 = vld [vmem:[#allocation5 + $0x3b8] sm:$0xff]
    %v252 = vld [vmem:[#allocation5 + $0x3c0] sm:$0xff]
    %v253 = vld [vmem:[#allocation5 + $0x3c8] sm:$0xff]
    %v254 = vld [vmem:[#allocation5 + $0x3d0] sm:$0xff]
    %v255 = vld [vmem:[#allocation5 + $0x3d8] sm:$0xff]
    %v256 = vld [vmem:[#allocation5 + $0x3e0] sm:$0xff]
    %v257 = vld [vmem:[#allocation5 + $0x3e8] sm:$0xff]
    %v258 = vld [vmem:[#allocation5 + $0x3f0] sm:$0xff]
    %v259 = vld [vmem:[#allocation5 + $0x3f8] sm:$0xff]
    %v260 = vld [vmem:[#allocation5 + $0x400] sm:$0xff]
    %v261 = vld [vmem:[#allocation5 + $0x408] sm:$0xff]
    %v262 = vld [vmem:[#allocation5 + $0x410] sm:$0xff]
    %v263 = vld [vmem:[#allocation5 + $0x418] sm:$0xff]
    %v264 = vld [vmem:[#allocation5 + $0x420] sm:$0xff]
    %v265 = vld [vmem:[#allocation5 + $0x428] sm:$0xff]
    %v266 = vld [vmem:[#allocation5 + $0x430] sm:$0xff]
    %v267 = vld [vmem:[#allocation5 + $0x438] sm:$0xff]
    %v268 = vld [vmem:[#allocation5 + $0x440] sm:$0xff]
    %v269 = vld [vmem:[#allocation5 + $0x448] sm:$0xff]
    %v270 = vld [vmem:[#allocation5 + $0x450] sm:$0xff]
    %v271 = vld [vmem:[#allocation5 + $0x458] sm:$0xff]
    %v272 = vld [vmem:[#allocation5 + $0x460] sm:$0xff]
    %v273 = vld [vmem:[#allocation5 + $0x468] sm:$0xff]
    %v274 = vld [vmem:[#allocation5 + $0x470] sm:$0xff]
    %v275 = vld [vmem:[#allocation5 + $0x478] sm:$0xff]
    %v276 = vld [vmem:[#allocation5 + $0x480] sm:$0xff]
    %v277 = vld [vmem:[#allocation5 + $0x488] sm:$0xff]
    %v278 = vld [vmem:[#allocation5 + $0x490] sm:$0xff]
    %v279 = vld [vmem:[#allocation5 + $0x498] sm:$0xff]
    %v280 = vld [vmem:[#allocation5 + $0x4a0] sm:$0xff]
    %v281 = vld [vmem:[#allocation5 + $0x4a8] sm:$0xff]
    %v282 = vld [vmem:[#allocation5 + $0x4b0] sm:$0xff]
    %v283 = vld [vmem:[#allocation5 + $0x4b8] sm:$0xff]
    %v284 = vld [vmem:[#allocation5 + $0x4c0] sm:$0xff]
    %v285 = vld [vmem:[#allocation5 + $0x4c8] sm:$0xff]
    %v286 = vld [vmem:[#allocation5 + $0x4d0] sm:$0xff]
    %v287 = vld [vmem:[#allocation5 + $0x4d8] sm:$0xff]
    %v288 = vld [vmem:[#allocation5 + $0x4e0] sm:$0xff]
    %v289 = vld [vmem:[#allocation5 + $0x4e8] sm:$0xff]
    %v290 = vld [vmem:[#allocation5 + $0x4f0] sm:$0xff]
    %v291 = vld [vmem:[#allocation5 + $0x4f8] sm:$0xff]
    %v292 = vld [vmem:[#allocation5 + $0x500] sm:$0xff]
    %v293 = vld [vmem:[#allocation5 + $0x508] sm:$0xff]
    %v294 = vld [vmem:[#allocation5 + $0x510] sm:$0xff]
    %v295 = vld [vmem:[#allocation5 + $0x518] sm:$0xff]
    %v296 = vld [vmem:[#allocation5 + $0x520] sm:$0xff]
    %v297 = vld [vmem:[#allocation5 + $0x528] sm:$0xff]
    %v298 = vld [vmem:[#allocation5 + $0x530] sm:$0xff]
    %v299 = vld [vmem:[#allocation5 + $0x538] sm:$0xff]
    %v300 = vld [vmem:[#allocation5 + $0x540] sm:$0xff]
    %v301 = vld [vmem:[#allocation5 + $0x548] sm:$0xff]
    %v302 = vld [vmem:[#allocation5 + $0x550] sm:$0xff]
    %v303 = vld [vmem:[#allocation5 + $0x558] sm:$0xff]
    %v304 = vld [vmem:[#allocation5 + $0x560] sm:$0xff]
    %v305 = vld [vmem:[#allocation5 + $0x568] sm:$0xff]
    %v306 = vld [vmem:[#allocation5 + $0x570] sm:$0xff]
    %v307 = vld [vmem:[#allocation5 + $0x578] sm:$0xff]
    %v308 = vld [vmem:[#allocation5 + $0x580] sm:$0xff]
    %v309 = vld [vmem:[#allocation5 + $0x588] sm:$0xff]
    %v310 = vld [vmem:[#allocation5 + $0x590] sm:$0xff]
    %v311 = vld [vmem:[#allocation5 + $0x598] sm:$0xff]
    %v312 = vld [vmem:[#allocation5 + $0x5a0] sm:$0xff]
    %v313 = vld [vmem:[#allocation5 + $0x5a8] sm:$0xff]
    %v314 = vld [vmem:[#allocation5 + $0x5b0] sm:$0xff]
    %v315 = vld [vmem:[#allocation5 + $0x5b8] sm:$0xff]
    %v316 = vld [vmem:[#allocation5 + $0x5c0] sm:$0xff]
    %v317 = vld [vmem:[#allocation5 + $0x5c8] sm:$0xff]
    %v318 = vld [vmem:[#allocation5 + $0x5d0] sm:$0xff]
    %v319 = vld [vmem:[#allocation5 + $0x5d8] sm:$0xff]
    %v320 = vld [vmem:[#allocation5 + $0x5e0] sm:$0xff]
    %v321 = vld [vmem:[#allocation5 + $0x5e8] sm:$0xff]
    %v322 = vld [vmem:[#allocation5 + $0x5f0] sm:$0xff]
    %v323 = vld [vmem:[#allocation5 + $0x5f8] sm:$0xff]
    %v324 = vld [vmem:[#allocation5 + $0x600] sm:$0xff]
    %v325 = vld [vmem:[#allocation5 + $0x608] sm:$0xff]
    %v326 = vld [vmem:[#allocation5 + $0x610] sm:$0xff]
    %v327 = vld [vmem:[#allocation5 + $0x618] sm:$0xff]
    %v328 = vld [vmem:[#allocation5 + $0x620] sm:$0xff]
    %v329 = vld [vmem:[#allocation5 + $0x628] sm:$0xff]
    %v330 = vld [vmem:[#allocation5 + $0x630] sm:$0xff]
    %v331 = vld [vmem:[#allocation5 + $0x638] sm:$0xff]
    %v332 = vld [vmem:[#allocation5 + $0x640] sm:$0xff]
    %v333 = vld [vmem:[#allocation5 + $0x648] sm:$0xff]
    %v334 = vld [vmem:[#allocation5 + $0x650] sm:$0xff]
    %v335 = vld [vmem:[#allocation5 + $0x658] sm:$0xff]
    %v336 = vld [vmem:[#allocation5 + $0x660] sm:$0xff]
    %v337 = vld [vmem:[#allocation5 + $0x668] sm:$0xff]
    %v338 = vld [vmem:[#allocation5 + $0x670] sm:$0xff]
    %v339 = vld [vmem:[#allocation5 + $0x678] sm:$0xff]
    %v340 = vld [vmem:[#allocation5 + $0x680] sm:$0xff]
    %v341 = vld [vmem:[#allocation5 + $0x688] sm:$0xff]
    %v342 = vld [vmem:[#allocation5 + $0x690] sm:$0xff]
    %v343 = vld [vmem:[#allocation5 + $0x698] sm:$0xff]
    %v344 = vld [vmem:[#allocation5 + $0x6a0] sm:$0xff]
    %v345 = vld [vmem:[#allocation5 + $0x6a8] sm:$0xff]
    %v346 = vld [vmem:[#allocation5 + $0x6b0] sm:$0xff]
    %v347 = vld [vmem:[#allocation5 + $0x6b8] sm:$0xff]
    %v348 = vld [vmem:[#allocation5 + $0x6c0] sm:$0xff]
    %v349 = vld [vmem:[#allocation5 + $0x6c8] sm:$0xff]
    %v350 = vld [vmem:[#allocation5 + $0x6d0] sm:$0xff]
    %v351 = vld [vmem:[#allocation5 + $0x6d8] sm:$0xff]
    %v352 = vld [vmem:[#allocation5 + $0x6e0] sm:$0xff]
    %v353 = vld [vmem:[#allocation5 + $0x6e8] sm:$0xff]
    %v354 = vld [vmem:[#allocation5 + $0x6f0] sm:$0xff]
    %v355 = vld [vmem:[#allocation5 + $0x6f8] sm:$0xff]
    %v356 = vld [vmem:[#allocation5 + $0x700] sm:$0xff]
    %v357 = vld [vmem:[#allocation5 + $0x708] sm:$0xff]
    %v358 = vld [vmem:[#allocation5 + $0x710] sm:$0xff]
    %v359 = vld [vmem:[#allocation5 + $0x718] sm:$0xff]
    %v360 = vld [vmem:[#allocation5 + $0x720] sm:$0xff]
    %v361 = vld [vmem:[#allocation5 + $0x728] sm:$0xff]
    %v362 = vld [vmem:[#allocation5 + $0x730] sm:$0xff]
    %v363 = vld [vmem:[#allocation5 + $0x738] sm:$0xff]
    %v364 = vld [vmem:[#allocation5 + $0x740] sm:$0xff]
    %v365 = vld [vmem:[#allocation5 + $0x748] sm:$0xff]
    %v366 = vld [vmem:[#allocation5 + $0x750] sm:$0xff]
    %v367 = vld [vmem:[#allocation5 + $0x758] sm:$0xff]
    %v368 = vld [vmem:[#allocation5 + $0x760] sm:$0xff]
    %v369 = vld [vmem:[#allocation5 + $0x768] sm:$0xff]
    %v370 = vld [vmem:[#allocation5 + $0x770] sm:$0xff]
    %v371 = vld [vmem:[#allocation5 + $0x778] sm:$0xff]
    %v372 = vld [vmem:[#allocation5 + $0x780] sm:$0xff]
    %v373 = vld [vmem:[#allocation5 + $0x788] sm:$0xff]
    %v374 = vld [vmem:[#allocation5 + $0x790] sm:$0xff]
    %v375 = vld [vmem:[#allocation5 + $0x798] sm:$0xff]
    %v376 = vld [vmem:[#allocation5 + $0x7a0] sm:$0xff]
    %v377 = vld [vmem:[#allocation5 + $0x7a8] sm:$0xff]
    %v378 = vld [vmem:[#allocation5 + $0x7b0] sm:$0xff]
    %v379 = vld [vmem:[#allocation5 + $0x7b8] sm:$0xff]
    %v380 = vld [vmem:[#allocation5 + $0x7c0] sm:$0xff]
    %v381 = vld [vmem:[#allocation5 + $0x7c8] sm:$0xff]
    %v382 = vld [vmem:[#allocation5 + $0x7d0] sm:$0xff]
    %v383 = vld [vmem:[#allocation5 + $0x7d8] sm:$0xff]
    %v384 = vld [vmem:[#allocation5 + $0x7e0] sm:$0xff]
    %v385 = vld [vmem:[#allocation5 + $0x7e8] sm:$0xff]
    %v386 = vld [vmem:[#allocation5 + $0x7f0] sm:$0xff]
    %v387 = vld [vmem:[#allocation5 + $0x7f8] sm:$0xff]
    %v388 = vunpack.c.l.s8.bf16 %v132
    %v389 = vunpack.c.l.s8.bf16 %v133
    %v390 = vunpack.c.l.s8.bf16 %v134
    %v391 = vunpack.c.l.s8.bf16 %v135
    %v392 = vunpack.c.h.s8.bf16 %v132
    %v393 = vunpack.c.h.s8.bf16 %v133
    %v394 = vunpack.c.h.s8.bf16 %v134
    %v395 = vunpack.c.h.s8.bf16 %v135
    %v396 = vunpack.c.l.s8.bf16 %v136
    %v397 = vunpack.c.l.s8.bf16 %v137
    %v398 = vunpack.c.l.s8.bf16 %v138
    %v399 = vunpack.c.l.s8.bf16 %v139
    %v400 = vunpack.c.h.s8.bf16 %v136
    %v401 = vunpack.c.h.s8.bf16 %v137
    %v402 = vunpack.c.h.s8.bf16 %v138
    %v403 = vunpack.c.h.s8.bf16 %v139
    %v404 = vunpack.c.l.s8.bf16 %v140
    %v405 = vunpack.c.l.s8.bf16 %v141
    %v406 = vunpack.c.l.s8.bf16 %v142
    %v407 = vunpack.c.l.s8.bf16 %v143
    %v408 = vunpack.c.h.s8.bf16 %v140
    %v409 = vunpack.c.h.s8.bf16 %v141
    %v410 = vunpack.c.h.s8.bf16 %v142
    %v411 = vunpack.c.h.s8.bf16 %v143
    %v412 = vunpack.c.l.s8.bf16 %v144
    %v413 = vunpack.c.l.s8.bf16 %v145
    %v414 = vunpack.c.l.s8.bf16 %v146
    %v415 = vunpack.c.l.s8.bf16 %v147
    %v416 = vunpack.c.h.s8.bf16 %v144
    %v417 = vunpack.c.h.s8.bf16 %v145
    %v418 = vunpack.c.h.s8.bf16 %v146
    %v419 = vunpack.c.h.s8.bf16 %v147
    %v420 = vunpack.c.l.s8.bf16 %v148
    %v421 = vunpack.c.l.s8.bf16 %v149
    %v422 = vunpack.c.l.s8.bf16 %v150
    %v423 = vunpack.c.l.s8.bf16 %v151
    %v424 = vunpack.c.h.s8.bf16 %v148
    %v425 = vunpack.c.h.s8.bf16 %v149
    %v426 = vunpack.c.h.s8.bf16 %v150
    %v427 = vunpack.c.h.s8.bf16 %v151
    %v428 = vunpack.c.l.s8.bf16 %v152
    %v429 = vunpack.c.l.s8.bf16 %v153
    %v430 = vunpack.c.l.s8.bf16 %v154
    %v431 = vunpack.c.l.s8.bf16 %v155
    %v432 = vunpack.c.h.s8.bf16 %v152
    %v433 = vunpack.c.h.s8.bf16 %v153
    %v434 = vunpack.c.h.s8.bf16 %v154
    %v435 = vunpack.c.h.s8.bf16 %v155
    %v436 = vunpack.c.l.s8.bf16 %v156
    %v437 = vunpack.c.l.s8.bf16 %v157
    %v438 = vunpack.c.l.s8.bf16 %v158
    %v439 = vunpack.c.l.s8.bf16 %v159
    %v440 = vunpack.c.h.s8.bf16 %v156
    %v441 = vunpack.c.h.s8.bf16 %v157
    %v442 = vunpack.c.h.s8.bf16 %v158
    %v443 = vunpack.c.h.s8.bf16 %v159
    %v444 = vunpack.c.l.s8.bf16 %v160
    %v445 = vunpack.c.l.s8.bf16 %v161
    %v446 = vunpack.c.l.s8.bf16 %v162
    %v447 = vunpack.c.l.s8.bf16 %v163
    %v448 = vunpack.c.h.s8.bf16 %v160
    %v449 = vunpack.c.h.s8.bf16 %v161
    %v450 = vunpack.c.h.s8.bf16 %v162
    %v451 = vunpack.c.h.s8.bf16 %v163
    %v452 = vunpack.c.l.s8.bf16 %v164
    %v453 = vunpack.c.l.s8.bf16 %v165
    %v454 = vunpack.c.l.s8.bf16 %v166
    %v455 = vunpack.c.l.s8.bf16 %v167
    %v456 = vunpack.c.h.s8.bf16 %v164
    %v457 = vunpack.c.h.s8.bf16 %v165
    %v458 = vunpack.c.h.s8.bf16 %v166
    %v459 = vunpack.c.h.s8.bf16 %v167
    %v460 = vunpack.c.l.s8.bf16 %v168
    %v461 = vunpack.c.l.s8.bf16 %v169
    %v462 = vunpack.c.l.s8.bf16 %v170
    %v463 = vunpack.c.l.s8.bf16 %v171
    %v464 = vunpack.c.h.s8.bf16 %v168
    %v465 = vunpack.c.h.s8.bf16 %v169
    %v466 = vunpack.c.h.s8.bf16 %v170
    %v467 = vunpack.c.h.s8.bf16 %v171
    %v468 = vunpack.c.l.s8.bf16 %v172
    %v469 = vunpack.c.l.s8.bf16 %v173
    %v470 = vunpack.c.l.s8.bf16 %v174
    %v471 = vunpack.c.l.s8.bf16 %v175
    %v472 = vunpack.c.h.s8.bf16 %v172
    %v473 = vunpack.c.h.s8.bf16 %v173
    %v474 = vunpack.c.h.s8.bf16 %v174
    %v475 = vunpack.c.h.s8.bf16 %v175
    %v476 = vunpack.c.l.s8.bf16 %v176
    %v477 = vunpack.c.l.s8.bf16 %v177
    %v478 = vunpack.c.l.s8.bf16 %v178
    %v479 = vunpack.c.l.s8.bf16 %v179
    %v480 = vunpack.c.h.s8.bf16 %v176
    %v481 = vunpack.c.h.s8.bf16 %v177
    %v482 = vunpack.c.h.s8.bf16 %v178
    %v483 = vunpack.c.h.s8.bf16 %v179
    %v484 = vunpack.c.l.s8.bf16 %v180
    %v485 = vunpack.c.l.s8.bf16 %v181
    %v486 = vunpack.c.l.s8.bf16 %v182
    %v487 = vunpack.c.l.s8.bf16 %v183
    %v488 = vunpack.c.h.s8.bf16 %v180
    %v489 = vunpack.c.h.s8.bf16 %v181
    %v490 = vunpack.c.h.s8.bf16 %v182
    %v491 = vunpack.c.h.s8.bf16 %v183
    %v492 = vunpack.c.l.s8.bf16 %v184
    %v493 = vunpack.c.l.s8.bf16 %v185
    %v494 = vunpack.c.l.s8.bf16 %v186
    %v495 = vunpack.c.l.s8.bf16 %v187
    %v496 = vunpack.c.h.s8.bf16 %v184
    %v497 = vunpack.c.h.s8.bf16 %v185
    %v498 = vunpack.c.h.s8.bf16 %v186
    %v499 = vunpack.c.h.s8.bf16 %v187
    %v500 = vunpack.c.l.s8.bf16 %v188
    %v501 = vunpack.c.l.s8.bf16 %v189
    %v502 = vunpack.c.l.s8.bf16 %v190
    %v503 = vunpack.c.l.s8.bf16 %v191
    %v504 = vunpack.c.h.s8.bf16 %v188
    %v505 = vunpack.c.h.s8.bf16 %v189
    %v506 = vunpack.c.h.s8.bf16 %v190
    %v507 = vunpack.c.h.s8.bf16 %v191
    %v508 = vunpack.c.l.s8.bf16 %v192
    %v509 = vunpack.c.l.s8.bf16 %v193
    %v510 = vunpack.c.l.s8.bf16 %v194
    %v511 = vunpack.c.l.s8.bf16 %v195
    %v512 = vunpack.c.h.s8.bf16 %v192
    %v513 = vunpack.c.h.s8.bf16 %v193
    %v514 = vunpack.c.h.s8.bf16 %v194
    %v515 = vunpack.c.h.s8.bf16 %v195
    %v516 = vunpack.c.l.s8.bf16 %v196
    %v517 = vunpack.c.l.s8.bf16 %v197
    %v518 = vunpack.c.l.s8.bf16 %v198
    %v519 = vunpack.c.l.s8.bf16 %v199
    %v520 = vunpack.c.h.s8.bf16 %v196
    %v521 = vunpack.c.h.s8.bf16 %v197
    %v522 = vunpack.c.h.s8.bf16 %v198
    %v523 = vunpack.c.h.s8.bf16 %v199
    %v524 = vunpack.c.l.s8.bf16 %v200
    %v525 = vunpack.c.l.s8.bf16 %v201
    %v526 = vunpack.c.l.s8.bf16 %v202
    %v527 = vunpack.c.l.s8.bf16 %v203
    %v528 = vunpack.c.h.s8.bf16 %v200
    %v529 = vunpack.c.h.s8.bf16 %v201
    %v530 = vunpack.c.h.s8.bf16 %v202
    %v531 = vunpack.c.h.s8.bf16 %v203
    %v532 = vunpack.c.l.s8.bf16 %v204
    %v533 = vunpack.c.l.s8.bf16 %v205
    %v534 = vunpack.c.l.s8.bf16 %v206
    %v535 = vunpack.c.l.s8.bf16 %v207
    %v536 = vunpack.c.h.s8.bf16 %v204
    %v537 = vunpack.c.h.s8.bf16 %v205
    %v538 = vunpack.c.h.s8.bf16 %v206
    %v539 = vunpack.c.h.s8.bf16 %v207
    %v540 = vunpack.c.l.s8.bf16 %v208
    %v541 = vunpack.c.l.s8.bf16 %v209
    %v542 = vunpack.c.l.s8.bf16 %v210
    %v543 = vunpack.c.l.s8.bf16 %v211
    %v544 = vunpack.c.h.s8.bf16 %v208
    %v545 = vunpack.c.h.s8.bf16 %v209
    %v546 = vunpack.c.h.s8.bf16 %v210
    %v547 = vunpack.c.h.s8.bf16 %v211
    %v548 = vunpack.c.l.s8.bf16 %v212
    %v549 = vunpack.c.l.s8.bf16 %v213
    %v550 = vunpack.c.l.s8.bf16 %v214
    %v551 = vunpack.c.l.s8.bf16 %v215
    %v552 = vunpack.c.h.s8.bf16 %v212
    %v553 = vunpack.c.h.s8.bf16 %v213
    %v554 = vunpack.c.h.s8.bf16 %v214
    %v555 = vunpack.c.h.s8.bf16 %v215
    %v556 = vunpack.c.l.s8.bf16 %v216
    %v557 = vunpack.c.l.s8.bf16 %v217
    %v558 = vunpack.c.l.s8.bf16 %v218
    %v559 = vunpack.c.l.s8.bf16 %v219
    %v560 = vunpack.c.h.s8.bf16 %v216
    %v561 = vunpack.c.h.s8.bf16 %v217
    %v562 = vunpack.c.h.s8.bf16 %v218
    %v563 = vunpack.c.h.s8.bf16 %v219
    %v564 = vunpack.c.l.s8.bf16 %v220
    %v565 = vunpack.c.l.s8.bf16 %v221
    %v566 = vunpack.c.l.s8.bf16 %v222
    %v567 = vunpack.c.l.s8.bf16 %v223
    %v568 = vunpack.c.h.s8.bf16 %v220
    %v569 = vunpack.c.h.s8.bf16 %v221
    %v570 = vunpack.c.h.s8.bf16 %v222
    %v571 = vunpack.c.h.s8.bf16 %v223
    %v572 = vunpack.c.l.s8.bf16 %v224
    %v573 = vunpack.c.l.s8.bf16 %v225
    %v574 = vunpack.c.l.s8.bf16 %v226
    %v575 = vunpack.c.l.s8.bf16 %v227
    %v576 = vunpack.c.h.s8.bf16 %v224
    %v577 = vunpack.c.h.s8.bf16 %v225
    %v578 = vunpack.c.h.s8.bf16 %v226
    %v579 = vunpack.c.h.s8.bf16 %v227
    %v580 = vunpack.c.l.s8.bf16 %v228
    %v581 = vunpack.c.l.s8.bf16 %v229
    %v582 = vunpack.c.l.s8.bf16 %v230
    %v583 = vunpack.c.l.s8.bf16 %v231
    %v584 = vunpack.c.h.s8.bf16 %v228
    %v585 = vunpack.c.h.s8.bf16 %v229
    %v586 = vunpack.c.h.s8.bf16 %v230
    %v587 = vunpack.c.h.s8.bf16 %v231
    %v588 = vunpack.c.l.s8.bf16 %v232
    %v589 = vunpack.c.l.s8.bf16 %v233
    %v590 = vunpack.c.l.s8.bf16 %v234
    %v591 = vunpack.c.l.s8.bf16 %v235
    %v592 = vunpack.c.h.s8.bf16 %v232
    %v593 = vunpack.c.h.s8.bf16 %v233
    %v594 = vunpack.c.h.s8.bf16 %v234
    %v595 = vunpack.c.h.s8.bf16 %v235
    %v596 = vunpack.c.l.s8.bf16 %v236
    %v597 = vunpack.c.l.s8.bf16 %v237
    %v598 = vunpack.c.l.s8.bf16 %v238
    %v599 = vunpack.c.l.s8.bf16 %v239
    %v600 = vunpack.c.h.s8.bf16 %v236
    %v601 = vunpack.c.h.s8.bf16 %v237
    %v602 = vunpack.c.h.s8.bf16 %v238
    %v603 = vunpack.c.h.s8.bf16 %v239
    %v604 = vunpack.c.l.s8.bf16 %v240
    %v605 = vunpack.c.l.s8.bf16 %v241
    %v606 = vunpack.c.l.s8.bf16 %v242
    %v607 = vunpack.c.l.s8.bf16 %v243
    %v608 = vunpack.c.h.s8.bf16 %v240
    %v609 = vunpack.c.h.s8.bf16 %v241
    %v610 = vunpack.c.h.s8.bf16 %v242
    %v611 = vunpack.c.h.s8.bf16 %v243
    %v612 = vunpack.c.l.s8.bf16 %v244
    %v613 = vunpack.c.l.s8.bf16 %v245
    %v614 = vunpack.c.l.s8.bf16 %v246
    %v615 = vunpack.c.l.s8.bf16 %v247
    %v616 = vunpack.c.h.s8.bf16 %v244
    %v617 = vunpack.c.h.s8.bf16 %v245
    %v618 = vunpack.c.h.s8.bf16 %v246
    %v619 = vunpack.c.h.s8.bf16 %v247
    %v620 = vunpack.c.l.s8.bf16 %v248
    %v621 = vunpack.c.l.s8.bf16 %v249
    %v622 = vunpack.c.l.s8.bf16 %v250
    %v623 = vunpack.c.l.s8.bf16 %v251
    %v624 = vunpack.c.h.s8.bf16 %v248
    %v625 = vunpack.c.h.s8.bf16 %v249
    %v626 = vunpack.c.h.s8.bf16 %v250
    %v627 = vunpack.c.h.s8.bf16 %v251
    %v628 = vunpack.c.l.s8.bf16 %v252
    %v629 = vunpack.c.l.s8.bf16 %v253
    %v630 = vunpack.c.l.s8.bf16 %v254
    %v631 = vunpack.c.l.s8.bf16 %v255
    %v632 = vunpack.c.h.s8.bf16 %v252
    %v633 = vunpack.c.h.s8.bf16 %v253
    %v634 = vunpack.c.h.s8.bf16 %v254
    %v635 = vunpack.c.h.s8.bf16 %v255
    %v636 = vunpack.c.l.s8.bf16 %v256
    %v637 = vunpack.c.l.s8.bf16 %v257
    %v638 = vunpack.c.l.s8.bf16 %v258
    %v639 = vunpack.c.l.s8.bf16 %v259
    %v640 = vunpack.c.h.s8.bf16 %v256
    %v641 = vunpack.c.h.s8.bf16 %v257
    %v642 = vunpack.c.h.s8.bf16 %v258
    %v643 = vunpack.c.h.s8.bf16 %v259
    %v644 = vunpack.c.l.s8.bf16 %v260
    %v645 = vunpack.c.l.s8.bf16 %v261
    %v646 = vunpack.c.l.s8.bf16 %v262
    %v647 = vunpack.c.l.s8.bf16 %v263
    %v648 = vunpack.c.h.s8.bf16 %v260
    %v649 = vunpack.c.h.s8.bf16 %v261
    %v650 = vunpack.c.h.s8.bf16 %v262
    %v651 = vunpack.c.h.s8.bf16 %v263
    %v652 = vunpack.c.l.s8.bf16 %v264
    %v653 = vunpack.c.l.s8.bf16 %v265
    %v654 = vunpack.c.l.s8.bf16 %v266
    %v655 = vunpack.c.l.s8.bf16 %v267
    %v656 = vunpack.c.h.s8.bf16 %v264
    %v657 = vunpack.c.h.s8.bf16 %v265
    %v658 = vunpack.c.h.s8.bf16 %v266
    %v659 = vunpack.c.h.s8.bf16 %v267
    %v660 = vunpack.c.l.s8.bf16 %v268
    %v661 = vunpack.c.l.s8.bf16 %v269
    %v662 = vunpack.c.l.s8.bf16 %v270
    %v663 = vunpack.c.l.s8.bf16 %v271
    %v664 = vunpack.c.h.s8.bf16 %v268
    %v665 = vunpack.c.h.s8.bf16 %v269
    %v666 = vunpack.c.h.s8.bf16 %v270
    %v667 = vunpack.c.h.s8.bf16 %v271
    %v668 = vunpack.c.l.s8.bf16 %v272
    %v669 = vunpack.c.l.s8.bf16 %v273
    %v670 = vunpack.c.l.s8.bf16 %v274
    %v671 = vunpack.c.l.s8.bf16 %v275
    %v672 = vunpack.c.h.s8.bf16 %v272
    %v673 = vunpack.c.h.s8.bf16 %v273
    %v674 = vunpack.c.h.s8.bf16 %v274
    %v675 = vunpack.c.h.s8.bf16 %v275
    %v676 = vunpack.c.l.s8.bf16 %v276
    %v677 = vunpack.c.l.s8.bf16 %v277
    %v678 = vunpack.c.l.s8.bf16 %v278
    %v679 = vunpack.c.l.s8.bf16 %v279
    %v680 = vunpack.c.h.s8.bf16 %v276
    %v681 = vunpack.c.h.s8.bf16 %v277
    %v682 = vunpack.c.h.s8.bf16 %v278
    %v683 = vunpack.c.h.s8.bf16 %v279
    %v684 = vunpack.c.l.s8.bf16 %v280
    %v685 = vunpack.c.l.s8.bf16 %v281
    %v686 = vunpack.c.l.s8.bf16 %v282
    %v687 = vunpack.c.l.s8.bf16 %v283
    %v688 = vunpack.c.h.s8.bf16 %v280
    %v689 = vunpack.c.h.s8.bf16 %v281
    %v690 = vunpack.c.h.s8.bf16 %v282
    %v691 = vunpack.c.h.s8.bf16 %v283
    %v692 = vunpack.c.l.s8.bf16 %v284
    %v693 = vunpack.c.l.s8.bf16 %v285
    %v694 = vunpack.c.l.s8.bf16 %v286
    %v695 = vunpack.c.l.s8.bf16 %v287
    %v696 = vunpack.c.h.s8.bf16 %v284
    %v697 = vunpack.c.h.s8.bf16 %v285
    %v698 = vunpack.c.h.s8.bf16 %v286
    %v699 = vunpack.c.h.s8.bf16 %v287
    %v700 = vunpack.c.l.s8.bf16 %v288
    %v701 = vunpack.c.l.s8.bf16 %v289
    %v702 = vunpack.c.l.s8.bf16 %v290
    %v703 = vunpack.c.l.s8.bf16 %v291
    %v704 = vunpack.c.h.s8.bf16 %v288
    %v705 = vunpack.c.h.s8.bf16 %v289
    %v706 = vunpack.c.h.s8.bf16 %v290
    %v707 = vunpack.c.h.s8.bf16 %v291
    %v708 = vunpack.c.l.s8.bf16 %v292
    %v709 = vunpack.c.l.s8.bf16 %v293
    %v710 = vunpack.c.l.s8.bf16 %v294
    %v711 = vunpack.c.l.s8.bf16 %v295
    %v712 = vunpack.c.h.s8.bf16 %v292
    %v713 = vunpack.c.h.s8.bf16 %v293
    %v714 = vunpack.c.h.s8.bf16 %v294
    %v715 = vunpack.c.h.s8.bf16 %v295
    %v716 = vunpack.c.l.s8.bf16 %v296
    %v717 = vunpack.c.l.s8.bf16 %v297
    %v718 = vunpack.c.l.s8.bf16 %v298
    %v719 = vunpack.c.l.s8.bf16 %v299
    %v720 = vunpack.c.h.s8.bf16 %v296
    %v721 = vunpack.c.h.s8.bf16 %v297
    %v722 = vunpack.c.h.s8.bf16 %v298
    %v723 = vunpack.c.h.s8.bf16 %v299
    %v724 = vunpack.c.l.s8.bf16 %v300
    %v725 = vunpack.c.l.s8.bf16 %v301
    %v726 = vunpack.c.l.s8.bf16 %v302
    %v727 = vunpack.c.l.s8.bf16 %v303
    %v728 = vunpack.c.h.s8.bf16 %v300
    %v729 = vunpack.c.h.s8.bf16 %v301
    %v730 = vunpack.c.h.s8.bf16 %v302
    %v731 = vunpack.c.h.s8.bf16 %v303
    %v732 = vunpack.c.l.s8.bf16 %v304
    %v733 = vunpack.c.l.s8.bf16 %v305
    %v734 = vunpack.c.l.s8.bf16 %v306
    %v735 = vunpack.c.l.s8.bf16 %v307
    %v736 = vunpack.c.h.s8.bf16 %v304
    %v737 = vunpack.c.h.s8.bf16 %v305
    %v738 = vunpack.c.h.s8.bf16 %v306
    %v739 = vunpack.c.h.s8.bf16 %v307
    %v740 = vunpack.c.l.s8.bf16 %v308
    %v741 = vunpack.c.l.s8.bf16 %v309
    %v742 = vunpack.c.l.s8.bf16 %v310
    %v743 = vunpack.c.l.s8.bf16 %v311
    %v744 = vunpack.c.h.s8.bf16 %v308
    %v745 = vunpack.c.h.s8.bf16 %v309
    %v746 = vunpack.c.h.s8.bf16 %v310
    %v747 = vunpack.c.h.s8.bf16 %v311
    %v748 = vunpack.c.l.s8.bf16 %v312
    %v749 = vunpack.c.l.s8.bf16 %v313
    %v750 = vunpack.c.l.s8.bf16 %v314
    %v751 = vunpack.c.l.s8.bf16 %v315
    %v752 = vunpack.c.h.s8.bf16 %v312
    %v753 = vunpack.c.h.s8.bf16 %v313
    %v754 = vunpack.c.h.s8.bf16 %v314
    %v755 = vunpack.c.h.s8.bf16 %v315
    %v756 = vunpack.c.l.s8.bf16 %v316
    %v757 = vunpack.c.l.s8.bf16 %v317
    %v758 = vunpack.c.l.s8.bf16 %v318
    %v759 = vunpack.c.l.s8.bf16 %v319
    %v760 = vunpack.c.h.s8.bf16 %v316
    %v761 = vunpack.c.h.s8.bf16 %v317
    %v762 = vunpack.c.h.s8.bf16 %v318
    %v763 = vunpack.c.h.s8.bf16 %v319
    %v764 = vunpack.c.l.s8.bf16 %v320
    %v765 = vunpack.c.l.s8.bf16 %v321
    %v766 = vunpack.c.l.s8.bf16 %v322
    %v767 = vunpack.c.l.s8.bf16 %v323
    %v768 = vunpack.c.h.s8.bf16 %v320
    %v769 = vunpack.c.h.s8.bf16 %v321
    %v770 = vunpack.c.h.s8.bf16 %v322
    %v771 = vunpack.c.h.s8.bf16 %v323
    %v772 = vunpack.c.l.s8.bf16 %v324
    %v773 = vunpack.c.l.s8.bf16 %v325
    %v774 = vunpack.c.l.s8.bf16 %v326
    %v775 = vunpack.c.l.s8.bf16 %v327
    %v776 = vunpack.c.h.s8.bf16 %v324
    %v777 = vunpack.c.h.s8.bf16 %v325
    %v778 = vunpack.c.h.s8.bf16 %v326
    %v779 = vunpack.c.h.s8.bf16 %v327
    %v780 = vunpack.c.l.s8.bf16 %v328
    %v781 = vunpack.c.l.s8.bf16 %v329
    %v782 = vunpack.c.l.s8.bf16 %v330
    %v783 = vunpack.c.l.s8.bf16 %v331
    %v784 = vunpack.c.h.s8.bf16 %v328
    %v785 = vunpack.c.h.s8.bf16 %v329
    %v786 = vunpack.c.h.s8.bf16 %v330
    %v787 = vunpack.c.h.s8.bf16 %v331
    %v788 = vunpack.c.l.s8.bf16 %v332
    %v789 = vunpack.c.l.s8.bf16 %v333
    %v790 = vunpack.c.l.s8.bf16 %v334
    %v791 = vunpack.c.l.s8.bf16 %v335
    %v792 = vunpack.c.h.s8.bf16 %v332
    %v793 = vunpack.c.h.s8.bf16 %v333
    %v794 = vunpack.c.h.s8.bf16 %v334
    %v795 = vunpack.c.h.s8.bf16 %v335
    %v796 = vunpack.c.l.s8.bf16 %v336
    %v797 = vunpack.c.l.s8.bf16 %v337
    %v798 = vunpack.c.l.s8.bf16 %v338
    %v799 = vunpack.c.l.s8.bf16 %v339
    %v800 = vunpack.c.h.s8.bf16 %v336
    %v801 = vunpack.c.h.s8.bf16 %v337
    %v802 = vunpack.c.h.s8.bf16 %v338
    %v803 = vunpack.c.h.s8.bf16 %v339
    %v804 = vunpack.c.l.s8.bf16 %v340
    %v805 = vunpack.c.l.s8.bf16 %v341
    %v806 = vunpack.c.l.s8.bf16 %v342
    %v807 = vunpack.c.l.s8.bf16 %v343
    %v808 = vunpack.c.h.s8.bf16 %v340
    %v809 = vunpack.c.h.s8.bf16 %v341
    %v810 = vunpack.c.h.s8.bf16 %v342
    %v811 = vunpack.c.h.s8.bf16 %v343
    %v812 = vunpack.c.l.s8.bf16 %v344
    %v813 = vunpack.c.l.s8.bf16 %v345
    %v814 = vunpack.c.l.s8.bf16 %v346
    %v815 = vunpack.c.l.s8.bf16 %v347
    %v816 = vunpack.c.h.s8.bf16 %v344
    %v817 = vunpack.c.h.s8.bf16 %v345
    %v818 = vunpack.c.h.s8.bf16 %v346
    %v819 = vunpack.c.h.s8.bf16 %v347
    %v820 = vunpack.c.l.s8.bf16 %v348
    %v821 = vunpack.c.l.s8.bf16 %v349
    %v822 = vunpack.c.l.s8.bf16 %v350
    %v823 = vunpack.c.l.s8.bf16 %v351
    %v824 = vunpack.c.h.s8.bf16 %v348
    %v825 = vunpack.c.h.s8.bf16 %v349
    %v826 = vunpack.c.h.s8.bf16 %v350
    %v827 = vunpack.c.h.s8.bf16 %v351
    %v828 = vunpack.c.l.s8.bf16 %v352
    %v829 = vunpack.c.l.s8.bf16 %v353
    %v830 = vunpack.c.l.s8.bf16 %v354
    %v831 = vunpack.c.l.s8.bf16 %v355
    %v832 = vunpack.c.h.s8.bf16 %v352
    %v833 = vunpack.c.h.s8.bf16 %v353
    %v834 = vunpack.c.h.s8.bf16 %v354
    %v835 = vunpack.c.h.s8.bf16 %v355
    %v836 = vunpack.c.l.s8.bf16 %v356
    %v837 = vunpack.c.l.s8.bf16 %v357
    %v838 = vunpack.c.l.s8.bf16 %v358
    %v839 = vunpack.c.l.s8.bf16 %v359
    %v840 = vunpack.c.h.s8.bf16 %v356
    %v841 = vunpack.c.h.s8.bf16 %v357
    %v842 = vunpack.c.h.s8.bf16 %v358
    %v843 = vunpack.c.h.s8.bf16 %v359
    %v844 = vunpack.c.l.s8.bf16 %v360
    %v845 = vunpack.c.l.s8.bf16 %v361
    %v846 = vunpack.c.l.s8.bf16 %v362
    %v847 = vunpack.c.l.s8.bf16 %v363
    %v848 = vunpack.c.h.s8.bf16 %v360
    %v849 = vunpack.c.h.s8.bf16 %v361
    %v850 = vunpack.c.h.s8.bf16 %v362
    %v851 = vunpack.c.h.s8.bf16 %v363
    %v852 = vunpack.c.l.s8.bf16 %v364
    %v853 = vunpack.c.l.s8.bf16 %v365
    %v854 = vunpack.c.l.s8.bf16 %v366
    %v855 = vunpack.c.l.s8.bf16 %v367
    %v856 = vunpack.c.h.s8.bf16 %v364
    %v857 = vunpack.c.h.s8.bf16 %v365
    %v858 = vunpack.c.h.s8.bf16 %v366
    %v859 = vunpack.c.h.s8.bf16 %v367
    %v860 = vunpack.c.l.s8.bf16 %v368
    %v861 = vunpack.c.l.s8.bf16 %v369
    %v862 = vunpack.c.l.s8.bf16 %v370
    %v863 = vunpack.c.l.s8.bf16 %v371
    %v864 = vunpack.c.h.s8.bf16 %v368
    %v865 = vunpack.c.h.s8.bf16 %v369
    %v866 = vunpack.c.h.s8.bf16 %v370
    %v867 = vunpack.c.h.s8.bf16 %v371
    %v868 = vunpack.c.l.s8.bf16 %v372
    %v869 = vunpack.c.l.s8.bf16 %v373
    %v870 = vunpack.c.l.s8.bf16 %v374
    %v871 = vunpack.c.l.s8.bf16 %v375
    %v872 = vunpack.c.h.s8.bf16 %v372
    %v873 = vunpack.c.h.s8.bf16 %v373
    %v874 = vunpack.c.h.s8.bf16 %v374
    %v875 = vunpack.c.h.s8.bf16 %v375
    %v876 = vunpack.c.l.s8.bf16 %v376
    %v877 = vunpack.c.l.s8.bf16 %v377
    %v878 = vunpack.c.l.s8.bf16 %v378
    %v879 = vunpack.c.l.s8.bf16 %v379
    %v880 = vunpack.c.h.s8.bf16 %v376
    %v881 = vunpack.c.h.s8.bf16 %v377
    %v882 = vunpack.c.h.s8.bf16 %v378
    %v883 = vunpack.c.h.s8.bf16 %v379
    %v884 = vunpack.c.l.s8.bf16 %v380
    %v885 = vunpack.c.l.s8.bf16 %v381
    %v886 = vunpack.c.l.s8.bf16 %v382
    %v887 = vunpack.c.l.s8.bf16 %v383
    %v888 = vunpack.c.h.s8.bf16 %v380
    %v889 = vunpack.c.h.s8.bf16 %v381
    %v890 = vunpack.c.h.s8.bf16 %v382
    %v891 = vunpack.c.h.s8.bf16 %v383
    %v892 = vunpack.c.l.s8.bf16 %v384
    %v893 = vunpack.c.l.s8.bf16 %v385
    %v894 = vunpack.c.l.s8.bf16 %v386
    %v895 = vunpack.c.l.s8.bf16 %v387
    %v896 = vunpack.c.h.s8.bf16 %v384
    %v897 = vunpack.c.h.s8.bf16 %v385
    %v898 = vunpack.c.h.s8.bf16 %v386
    %v899 = vunpack.c.h.s8.bf16 %v387
    %900 = vmatprep.subr.bf16.mxu0 %v417
    %901 = vmatpush1.bf16.msra.mxu0 %v416
    %902 = vmatprep.subr.bf16.mxu0 %v413
    %903 = vmatpush1.bf16.msra.mxu0 %v412
    %904 = vmatprep.subr.bf16.mxu0 %v409
    %905 = vmatpush1.bf16.msra.mxu0 %v408
    %906 = vmatprep.subr.bf16.mxu0 %v405
    %907 = vmatpush1.bf16.msra.mxu0 %v404
    %908 = vmatprep.subr.bf16.mxu0 %v401
    %909 = vmatpush1.bf16.msra.mxu0 %v400
    %910 = vmatprep.subr.bf16.mxu0 %v397
    %911 = vmatpush1.bf16.msra.mxu0 %v396
    %912 = vmatprep.subr.bf16.mxu0 %v393
    %913 = vmatpush1.bf16.msra.mxu0 %v392
    %914 = vmatprep.subr.bf16.mxu0 %v389
    %915 = vmatpush1.bf16.msra.mxu0 %v388
    %916 = vmatprep.subr.bf16.mxu0 %v449
    %917 = vmatpush2.bf16.msra.mxu0 %v448
    %918 = vmatprep.subr.bf16.mxu0 %v445
    %919 = vmatpush2.bf16.msra.mxu0 %v444
    %920 = vmatprep.subr.bf16.mxu0 %v441
    %921 = vmatpush2.bf16.msra.mxu0 %v440
    %922 = vmatprep.subr.bf16.mxu0 %v437
    %923 = vmatpush2.bf16.msra.mxu0 %v436
    %924 = vmatprep.subr.bf16.mxu0 %v433
    %925 = vmatpush2.bf16.msra.mxu0 %v432
    %926 = vmatprep.subr.bf16.mxu0 %v429
    %927 = vmatpush2.bf16.msra.mxu0 %v428
    %928 = vmatprep.subr.bf16.mxu0 %v425
    %929 = vmatpush2.bf16.msra.mxu0 %v424
    %930 = vmatprep.subr.bf16.mxu0 %v421
    %931 = vmatpush2.bf16.msra.mxu0 %v420
    %932 = vmatprep.mubr.bf16.mxu0 %v117
    %933 = vmatmul.mubr.bf16.gmra.mxu0 %v116
    %v934 = vpop.f32.mrf.mxu0
    %v935 = vadd.f32 0.0, %v934
    %v936 = vpop.f32.mrf.mxu0
    %v937 = vadd.f32 0.0, %v936
    %v938 = vpop.f32.mrf.mxu0
    %v939 = vadd.f32 0.0, %v938
    %v940 = vpop.f32.mrf.mxu0
    %v941 = vadd.f32 0.0, %v940
    %942 = vdwg.mxu0
    %943 = vmatprep.subr.bf16.mxu0 %v481
    %944 = vmatpush1.bf16.msra.mxu0 %v480
    %945 = vmatprep.subr.bf16.mxu0 %v477
    %946 = vmatpush1.bf16.msra.mxu0 %v476
    %947 = vmatprep.subr.bf16.mxu0 %v473
    %948 = vmatpush1.bf16.msra.mxu0 %v472
    %949 = vmatprep.subr.bf16.mxu0 %v469
    %950 = vmatpush1.bf16.msra.mxu0 %v468
    %951 = vmatprep.subr.bf16.mxu0 %v465
    %952 = vmatpush1.bf16.msra.mxu0 %v464
    %953 = vmatprep.subr.bf16.mxu0 %v461
    %954 = vmatpush1.bf16.msra.mxu0 %v460
    %955 = vmatprep.subr.bf16.mxu0 %v457
    %956 = vmatpush1.bf16.msra.mxu0 %v456
    %957 = vmatprep.subr.bf16.mxu0 %v453
    %958 = vmatpush1.bf16.msra.mxu0 %v452
    %959 = vmatprep.subr.bf16.mxu0 %v513
    %960 = vmatpush2.bf16.msra.mxu0 %v512
    %961 = vmatprep.subr.bf16.mxu0 %v509
    %962 = vmatpush2.bf16.msra.mxu0 %v508
    %963 = vmatprep.subr.bf16.mxu0 %v505
    %964 = vmatpush2.bf16.msra.mxu0 %v504
    %965 = vmatprep.subr.bf16.mxu0 %v501
    %966 = vmatpush2.bf16.msra.mxu0 %v500
    %967 = vmatprep.subr.bf16.mxu0 %v497
    %968 = vmatpush2.bf16.msra.mxu0 %v496
    %969 = vmatprep.subr.bf16.mxu0 %v493
    %970 = vmatpush2.bf16.msra.mxu0 %v492
    %971 = vmatprep.subr.bf16.mxu0 %v489
    %972 = vmatpush2.bf16.msra.mxu0 %v488
    %973 = vmatprep.subr.bf16.mxu0 %v485
    %974 = vmatpush2.bf16.msra.mxu0 %v484
    %975 = vmatprep.mubr.bf16.mxu0 %v119
    %976 = vmatmul.mubr.bf16.gmra.mxu0 %v118
    %v977 = vpop.f32.mrf.mxu0
    %v978 = vadd.f32 %v935, %v977
    %v979 = vpop.f32.mrf.mxu0
    %v980 = vadd.f32 %v937, %v979
    %v981 = vpop.f32.mrf.mxu0
    %v982 = vadd.f32 %v939, %v981
    %v983 = vpop.f32.mrf.mxu0
    %v984 = vadd.f32 %v941, %v983
    %985 = vdwg.mxu0
    %986 = vmatprep.subr.bf16.mxu0 %v545
    %987 = vmatpush1.bf16.msra.mxu0 %v544
    %988 = vmatprep.subr.bf16.mxu0 %v541
    %989 = vmatpush1.bf16.msra.mxu0 %v540
    %990 = vmatprep.subr.bf16.mxu0 %v537
    %991 = vmatpush1.bf16.msra.mxu0 %v536
    %992 = vmatprep.subr.bf16.mxu0 %v533
    %993 = vmatpush1.bf16.msra.mxu0 %v532
    %994 = vmatprep.subr.bf16.mxu0 %v529
    %995 = vmatpush1.bf16.msra.mxu0 %v528
    %996 = vmatprep.subr.bf16.mxu0 %v525
    %997 = vmatpush1.bf16.msra.mxu0 %v524
    %998 = vmatprep.subr.bf16.mxu0 %v521
    %999 = vmatpush1.bf16.msra.mxu0 %v520
    %1000 = vmatprep.subr.bf16.mxu0 %v517
    %1001 = vmatpush1.bf16.msra.mxu0 %v516
    %1002 = vmatprep.subr.bf16.mxu0 %v577
    %1003 = vmatpush2.bf16.msra.mxu0 %v576
    %1004 = vmatprep.subr.bf16.mxu0 %v573
    %1005 = vmatpush2.bf16.msra.mxu0 %v572
    %1006 = vmatprep.subr.bf16.mxu0 %v569
    %1007 = vmatpush2.bf16.msra.mxu0 %v568
    %1008 = vmatprep.subr.bf16.mxu0 %v565
    %1009 = vmatpush2.bf16.msra.mxu0 %v564
    %1010 = vmatprep.subr.bf16.mxu0 %v561
    %1011 = vmatpush2.bf16.msra.mxu0 %v560
    %1012 = vmatprep.subr.bf16.mxu0 %v557
    %1013 = vmatpush2.bf16.msra.mxu0 %v556
    %1014 = vmatprep.subr.bf16.mxu0 %v553
    %1015 = vmatpush2.bf16.msra.mxu0 %v552
    %1016 = vmatprep.subr.bf16.mxu0 %v549
    %1017 = vmatpush2.bf16.msra.mxu0 %v548
    %1018 = vmatprep.mubr.bf16.mxu0 %v121
    %1019 = vmatmul.mubr.bf16.gmra.mxu0 %v120
    %v1020 = vpop.f32.mrf.mxu0
    %v1021 = vadd.f32 %v978, %v1020
    %v1022 = vpop.f32.mrf.mxu0
    %v1023 = vadd.f32 %v980, %v1022
    %v1024 = vpop.f32.mrf.mxu0
    %v1025 = vadd.f32 %v982, %v1024
    %v1026 = vpop.f32.mrf.mxu0
    %v1027 = vadd.f32 %v984, %v1026
    %1028 = vdwg.mxu0
    %1029 = vmatprep.subr.bf16.mxu0 %v609
    %1030 = vmatpush1.bf16.msra.mxu0 %v608
    %1031 = vmatprep.subr.bf16.mxu0 %v605
    %1032 = vmatpush1.bf16.msra.mxu0 %v604
    %1033 = vmatprep.subr.bf16.mxu0 %v601
    %1034 = vmatpush1.bf16.msra.mxu0 %v600
    %1035 = vmatprep.subr.bf16.mxu0 %v597
    %1036 = vmatpush1.bf16.msra.mxu0 %v596
    %1037 = vmatprep.subr.bf16.mxu0 %v593
    %1038 = vmatpush1.bf16.msra.mxu0 %v592
    %1039 = vmatprep.subr.bf16.mxu0 %v589
    %1040 = vmatpush1.bf16.msra.mxu0 %v588
    %1041 = vmatprep.subr.bf16.mxu0 %v585
    %1042 = vmatpush1.bf16.msra.mxu0 %v584
    %1043 = vmatprep.subr.bf16.mxu0 %v581
    %1044 = vmatpush1.bf16.msra.mxu0 %v580
    %1045 = vmatprep.subr.bf16.mxu0 %v641
    %1046 = vmatpush2.bf16.msra.mxu0 %v640
    %1047 = vmatprep.subr.bf16.mxu0 %v637
    %1048 = vmatpush2.bf16.msra.mxu0 %v636
    %1049 = vmatprep.subr.bf16.mxu0 %v633
    %1050 = vmatpush2.bf16.msra.mxu0 %v632
    %1051 = vmatprep.subr.bf16.mxu0 %v629
    %1052 = vmatpush2.bf16.msra.mxu0 %v628
    %1053 = vmatprep.subr.bf16.mxu0 %v625
    %1054 = vmatpush2.bf16.msra.mxu0 %v624
    %1055 = vmatprep.subr.bf16.mxu0 %v621
    %1056 = vmatpush2.bf16.msra.mxu0 %v620
    %1057 = vmatprep.subr.bf16.mxu0 %v617
    %1058 = vmatpush2.bf16.msra.mxu0 %v616
    %1059 = vmatprep.subr.bf16.mxu0 %v613
    %1060 = vmatpush2.bf16.msra.mxu0 %v612
    %1061 = vmatprep.mubr.bf16.mxu0 %v123
    %1062 = vmatmul.mubr.bf16.gmra.mxu0 %v122
    %v1063 = vpop.f32.mrf.mxu0
    %v1064 = vadd.f32 %v1021, %v1063
    %v1065 = vpop.f32.mrf.mxu0
    %v1066 = vadd.f32 %v1023, %v1065
    %v1067 = vpop.f32.mrf.mxu0
    %v1068 = vadd.f32 %v1025, %v1067
    %v1069 = vpop.f32.mrf.mxu0
    %v1070 = vadd.f32 %v1027, %v1069
    %1071 = vdwg.mxu0
    %1072 = vmatprep.subr.bf16.mxu0 %v673
    %1073 = vmatpush1.bf16.msra.mxu0 %v672
    %1074 = vmatprep.subr.bf16.mxu0 %v669
    %1075 = vmatpush1.bf16.msra.mxu0 %v668
    %1076 = vmatprep.subr.bf16.mxu0 %v665
    %1077 = vmatpush1.bf16.msra.mxu0 %v664
    %1078 = vmatprep.subr.bf16.mxu0 %v661
    %1079 = vmatpush1.bf16.msra.mxu0 %v660
    %1080 = vmatprep.subr.bf16.mxu0 %v657
    %1081 = vmatpush1.bf16.msra.mxu0 %v656
    %1082 = vmatprep.subr.bf16.mxu0 %v653
    %1083 = vmatpush1.bf16.msra.mxu0 %v652
    %1084 = vmatprep.subr.bf16.mxu0 %v649
    %1085 = vmatpush1.bf16.msra.mxu0 %v648
    %1086 = vmatprep.subr.bf16.mxu0 %v645
    %1087 = vmatpush1.bf16.msra.mxu0 %v644
    %1088 = vmatprep.subr.bf16.mxu0 %v705
    %1089 = vmatpush2.bf16.msra.mxu0 %v704
    %1090 = vmatprep.subr.bf16.mxu0 %v701
    %1091 = vmatpush2.bf16.msra.mxu0 %v700
    %1092 = vmatprep.subr.bf16.mxu0 %v697
    %1093 = vmatpush2.bf16.msra.mxu0 %v696
    %1094 = vmatprep.subr.bf16.mxu0 %v693
    %1095 = vmatpush2.bf16.msra.mxu0 %v692
    %1096 = vmatprep.subr.bf16.mxu0 %v689
    %1097 = vmatpush2.bf16.msra.mxu0 %v688
    %1098 = vmatprep.subr.bf16.mxu0 %v685
    %1099 = vmatpush2.bf16.msra.mxu0 %v684
    %1100 = vmatprep.subr.bf16.mxu0 %v681
    %1101 = vmatpush2.bf16.msra.mxu0 %v680
    %1102 = vmatprep.subr.bf16.mxu0 %v677
    %1103 = vmatpush2.bf16.msra.mxu0 %v676
    %1104 = vmatprep.mubr.bf16.mxu0 %v125
    %1105 = vmatmul.mubr.bf16.gmra.mxu0 %v124
    %v1106 = vpop.f32.mrf.mxu0
    %v1107 = vadd.f32 %v1064, %v1106
    %v1108 = vpop.f32.mrf.mxu0
    %v1109 = vadd.f32 %v1066, %v1108
    %v1110 = vpop.f32.mrf.mxu0
    %v1111 = vadd.f32 %v1068, %v1110
    %v1112 = vpop.f32.mrf.mxu0
    %v1113 = vadd.f32 %v1070, %v1112
    %1114 = vdwg.mxu0
    %1115 = vmatprep.subr.bf16.mxu0 %v737
    %1116 = vmatpush1.bf16.msra.mxu0 %v736
    %1117 = vmatprep.subr.bf16.mxu0 %v733
    %1118 = vmatpush1.bf16.msra.mxu0 %v732
    %1119 = vmatprep.subr.bf16.mxu0 %v729
    %1120 = vmatpush1.bf16.msra.mxu0 %v728
    %1121 = vmatprep.subr.bf16.mxu0 %v725
    %1122 = vmatpush1.bf16.msra.mxu0 %v724
    %1123 = vmatprep.subr.bf16.mxu0 %v721
    %1124 = vmatpush1.bf16.msra.mxu0 %v720
    %1125 = vmatprep.subr.bf16.mxu0 %v717
    %1126 = vmatpush1.bf16.msra.mxu0 %v716
    %1127 = vmatprep.subr.bf16.mxu0 %v713
    %1128 = vmatpush1.bf16.msra.mxu0 %v712
    %1129 = vmatprep.subr.bf16.mxu0 %v709
    %1130 = vmatpush1.bf16.msra.mxu0 %v708
    %1131 = vmatprep.subr.bf16.mxu0 %v769
    %1132 = vmatpush2.bf16.msra.mxu0 %v768
    %1133 = vmatprep.subr.bf16.mxu0 %v765
    %1134 = vmatpush2.bf16.msra.mxu0 %v764
    %1135 = vmatprep.subr.bf16.mxu0 %v761
    %1136 = vmatpush2.bf16.msra.mxu0 %v760
    %1137 = vmatprep.subr.bf16.mxu0 %v757
    %1138 = vmatpush2.bf16.msra.mxu0 %v756
    %1139 = vmatprep.subr.bf16.mxu0 %v753
    %1140 = vmatpush2.bf16.msra.mxu0 %v752
    %1141 = vmatprep.subr.bf16.mxu0 %v749
    %1142 = vmatpush2.bf16.msra.mxu0 %v748
    %1143 = vmatprep.subr.bf16.mxu0 %v745
    %1144 = vmatpush2.bf16.msra.mxu0 %v744
    %1145 = vmatprep.subr.bf16.mxu0 %v741
    %1146 = vmatpush2.bf16.msra.mxu0 %v740
    %1147 = vmatprep.mubr.bf16.mxu0 %v127
    %1148 = vmatmul.mubr.bf16.gmra.mxu0 %v126
    %v1149 = vpop.f32.mrf.mxu0
    %v1150 = vadd.f32 %v1107, %v1149
    %v1151 = vpop.f32.mrf.mxu0
    %v1152 = vadd.f32 %v1109, %v1151
    %v1153 = vpop.f32.mrf.mxu0
    %v1154 = vadd.f32 %v1111, %v1153
    %v1155 = vpop.f32.mrf.mxu0
    %v1156 = vadd.f32 %v1113, %v1155
    %1157 = vdwg.mxu0
    %1158 = vmatprep.subr.bf16.mxu0 %v801
    %1159 = vmatpush1.bf16.msra.mxu0 %v800
    %1160 = vmatprep.subr.bf16.mxu0 %v797
    %1161 = vmatpush1.bf16.msra.mxu0 %v796
    %1162 = vmatprep.subr.bf16.mxu0 %v793
    %1163 = vmatpush1.bf16.msra.mxu0 %v792
    %1164 = vmatprep.subr.bf16.mxu0 %v789
    %1165 = vmatpush1.bf16.msra.mxu0 %v788
    %1166 = vmatprep.subr.bf16.mxu0 %v785
    %1167 = vmatpush1.bf16.msra.mxu0 %v784
    %1168 = vmatprep.subr.bf16.mxu0 %v781
    %1169 = vmatpush1.bf16.msra.mxu0 %v780
    %1170 = vmatprep.subr.bf16.mxu0 %v777
    %1171 = vmatpush1.bf16.msra.mxu0 %v776
    %1172 = vmatprep.subr.bf16.mxu0 %v773
    %1173 = vmatpush1.bf16.msra.mxu0 %v772
    %1174 = vmatprep.subr.bf16.mxu0 %v833
    %1175 = vmatpush2.bf16.msra.mxu0 %v832
    %1176 = vmatprep.subr.bf16.mxu0 %v829
    %1177 = vmatpush2.bf16.msra.mxu0 %v828
    %1178 = vmatprep.subr.bf16.mxu0 %v825
    %1179 = vmatpush2.bf16.msra.mxu0 %v824
    %1180 = vmatprep.subr.bf16.mxu0 %v821
    %1181 = vmatpush2.bf16.msra.mxu0 %v820
    %1182 = vmatprep.subr.bf16.mxu0 %v817
    %1183 = vmatpush2.bf16.msra.mxu0 %v816
    %1184 = vmatprep.subr.bf16.mxu0 %v813
    %1185 = vmatpush2.bf16.msra.mxu0 %v812
    %1186 = vmatprep.subr.bf16.mxu0 %v809
    %1187 = vmatpush2.bf16.msra.mxu0 %v808
    %1188 = vmatprep.subr.bf16.mxu0 %v805
    %1189 = vmatpush2.bf16.msra.mxu0 %v804
    %1190 = vmatprep.mubr.bf16.mxu0 %v129
    %1191 = vmatmul.mubr.bf16.gmra.mxu0 %v128
    %v1192 = vpop.f32.mrf.mxu0
    %v1193 = vadd.f32 %v1150, %v1192
    %v1194 = vpop.f32.mrf.mxu0
    %v1195 = vadd.f32 %v1152, %v1194
    %v1196 = vpop.f32.mrf.mxu0
    %v1197 = vadd.f32 %v1154, %v1196
    %v1198 = vpop.f32.mrf.mxu0
    %v1199 = vadd.f32 %v1156, %v1198
    %1200 = vdwg.mxu0
    %1201 = vmatprep.subr.bf16.mxu0 %v865
    %1202 = vmatpush1.bf16.msra.mxu0 %v864
    %1203 = vmatprep.subr.bf16.mxu0 %v861
    %1204 = vmatpush1.bf16.msra.mxu0 %v860
    %1205 = vmatprep.subr.bf16.mxu0 %v857
    %1206 = vmatpush1.bf16.msra.mxu0 %v856
    %1207 = vmatprep.subr.bf16.mxu0 %v853
    %1208 = vmatpush1.bf16.msra.mxu0 %v852
    %1209 = vmatprep.subr.bf16.mxu0 %v849
    %1210 = vmatpush1.bf16.msra.mxu0 %v848
    %1211 = vmatprep.subr.bf16.mxu0 %v845
    %1212 = vmatpush1.bf16.msra.mxu0 %v844
    %1213 = vmatprep.subr.bf16.mxu0 %v841
    %1214 = vmatpush1.bf16.msra.mxu0 %v840
    %1215 = vmatprep.subr.bf16.mxu0 %v837
    %1216 = vmatpush1.bf16.msra.mxu0 %v836
    %1217 = vmatprep.subr.bf16.mxu0 %v897
    %1218 = vmatpush2.bf16.msra.mxu0 %v896
    %1219 = vmatprep.subr.bf16.mxu0 %v893
    %1220 = vmatpush2.bf16.msra.mxu0 %v892
    %1221 = vmatprep.subr.bf16.mxu0 %v889
    %1222 = vmatpush2.bf16.msra.mxu0 %v888
    %1223 = vmatprep.subr.bf16.mxu0 %v885
    %1224 = vmatpush2.bf16.msra.mxu0 %v884
    %1225 = vmatprep.subr.bf16.mxu0 %v881
    %1226 = vmatpush2.bf16.msra.mxu0 %v880
    %1227 = vmatprep.subr.bf16.mxu0 %v877
    %1228 = vmatpush2.bf16.msra.mxu0 %v876
    %1229 = vmatprep.subr.bf16.mxu0 %v873
    %1230 = vmatpush2.bf16.msra.mxu0 %v872
    %1231 = vmatprep.subr.bf16.mxu0 %v869
    %1232 = vmatpush2.bf16.msra.mxu0 %v868
    %1233 = vmatprep.mubr.bf16.mxu0 %v131
    %1234 = vmatmul.mubr.bf16.gmra.mxu0 %v130
    %v1235 = vpop.f32.mrf.mxu0
    %v1236 = vadd.f32 %v1193, %v1235
    %v1237 = vpop.f32.mrf.mxu0
    %v1238 = vadd.f32 %v1195, %v1237
    %v1239 = vpop.f32.mrf.mxu0
    %v1240 = vadd.f32 %v1197, %v1239
    %v1241 = vpop.f32.mrf.mxu0
    %v1242 = vadd.f32 %v1199, %v1241
    %1243 = vdwg.mxu0
    %1244 = vmatprep.subr.bf16.mxu0 %v419
    %1245 = vmatpush1.bf16.msra.mxu0 %v418
    %1246 = vmatprep.subr.bf16.mxu0 %v415
    %1247 = vmatpush1.bf16.msra.mxu0 %v414
    %1248 = vmatprep.subr.bf16.mxu0 %v411
    %1249 = vmatpush1.bf16.msra.mxu0 %v410
    %1250 = vmatprep.subr.bf16.mxu0 %v407
    %1251 = vmatpush1.bf16.msra.mxu0 %v406
    %1252 = vmatprep.subr.bf16.mxu0 %v403
    %1253 = vmatpush1.bf16.msra.mxu0 %v402
    %1254 = vmatprep.subr.bf16.mxu0 %v399
    %1255 = vmatpush1.bf16.msra.mxu0 %v398
    %1256 = vmatprep.subr.bf16.mxu0 %v395
    %1257 = vmatpush1.bf16.msra.mxu0 %v394
    %1258 = vmatprep.subr.bf16.mxu0 %v391
    %1259 = vmatpush1.bf16.msra.mxu0 %v390
    %1260 = vmatprep.subr.bf16.mxu0 %v451
    %1261 = vmatpush2.bf16.msra.mxu0 %v450
    %1262 = vmatprep.subr.bf16.mxu0 %v447
    %1263 = vmatpush2.bf16.msra.mxu0 %v446
    %1264 = vmatprep.subr.bf16.mxu0 %v443
    %1265 = vmatpush2.bf16.msra.mxu0 %v442
    %1266 = vmatprep.subr.bf16.mxu0 %v439
    %1267 = vmatpush2.bf16.msra.mxu0 %v438
    %1268 = vmatprep.subr.bf16.mxu0 %v435
    %1269 = vmatpush2.bf16.msra.mxu0 %v434
    %1270 = vmatprep.subr.bf16.mxu0 %v431
    %1271 = vmatpush2.bf16.msra.mxu0 %v430
    %1272 = vmatprep.subr.bf16.mxu0 %v427
    %1273 = vmatpush2.bf16.msra.mxu0 %v426
    %1274 = vmatprep.subr.bf16.mxu0 %v423
    %1275 = vmatpush2.bf16.msra.mxu0 %v422
    %1276 = vmatprep.mubr.bf16.mxu0 %v117
    %1277 = vmatmul.mubr.bf16.gmra.mxu0 %v116
    %v1278 = vpop.f32.mrf.mxu0
    %v1279 = vadd.f32 0.0, %v1278
    %v1280 = vpop.f32.mrf.mxu0
    %v1281 = vadd.f32 0.0, %v1280
    %v1282 = vpop.f32.mrf.mxu0
    %v1283 = vadd.f32 0.0, %v1282
    %v1284 = vpop.f32.mrf.mxu0
    %v1285 = vadd.f32 0.0, %v1284
    %1286 = vdwg.mxu0
    %1287 = vmatprep.subr.bf16.mxu0 %v483
    %1288 = vmatpush1.bf16.msra.mxu0 %v482
    %1289 = vmatprep.subr.bf16.mxu0 %v479
    %1290 = vmatpush1.bf16.msra.mxu0 %v478
    %1291 = vmatprep.subr.bf16.mxu0 %v475
    %1292 = vmatpush1.bf16.msra.mxu0 %v474
    %1293 = vmatprep.subr.bf16.mxu0 %v471
    %1294 = vmatpush1.bf16.msra.mxu0 %v470
    %1295 = vmatprep.subr.bf16.mxu0 %v467
    %1296 = vmatpush1.bf16.msra.mxu0 %v466
    %1297 = vmatprep.subr.bf16.mxu0 %v463
    %1298 = vmatpush1.bf16.msra.mxu0 %v462
    %1299 = vmatprep.subr.bf16.mxu0 %v459
    %1300 = vmatpush1.bf16.msra.mxu0 %v458
    %1301 = vmatprep.subr.bf16.mxu0 %v455
    %1302 = vmatpush1.bf16.msra.mxu0 %v454
    %1303 = vmatprep.subr.bf16.mxu0 %v515
    %1304 = vmatpush2.bf16.msra.mxu0 %v514
    %1305 = vmatprep.subr.bf16.mxu0 %v511
    %1306 = vmatpush2.bf16.msra.mxu0 %v510
    %1307 = vmatprep.subr.bf16.mxu0 %v507
    %1308 = vmatpush2.bf16.msra.mxu0 %v506
    %1309 = vmatprep.subr.bf16.mxu0 %v503
    %1310 = vmatpush2.bf16.msra.mxu0 %v502
    %1311 = vmatprep.subr.bf16.mxu0 %v499
    %1312 = vmatpush2.bf16.msra.mxu0 %v498
    %1313 = vmatprep.subr.bf16.mxu0 %v495
    %1314 = vmatpush2.bf16.msra.mxu0 %v494
    %1315 = vmatprep.subr.bf16.mxu0 %v491
    %1316 = vmatpush2.bf16.msra.mxu0 %v490
    %1317 = vmatprep.subr.bf16.mxu0 %v487
    %1318 = vmatpush2.bf16.msra.mxu0 %v486
    %1319 = vmatprep.mubr.bf16.mxu0 %v119
    %1320 = vmatmul.mubr.bf16.gmra.mxu0 %v118
    %v1321 = vpop.f32.mrf.mxu0
    %v1322 = vadd.f32 %v1279, %v1321
    %v1323 = vpop.f32.mrf.mxu0
    %v1324 = vadd.f32 %v1281, %v1323
    %v1325 = vpop.f32.mrf.mxu0
    %v1326 = vadd.f32 %v1283, %v1325
    %v1327 = vpop.f32.mrf.mxu0
    %v1328 = vadd.f32 %v1285, %v1327
    %1329 = vdwg.mxu0
    %1330 = vmatprep.subr.bf16.mxu0 %v547
    %1331 = vmatpush1.bf16.msra.mxu0 %v546
    %1332 = vmatprep.subr.bf16.mxu0 %v543
    %1333 = vmatpush1.bf16.msra.mxu0 %v542
    %1334 = vmatprep.subr.bf16.mxu0 %v539
    %1335 = vmatpush1.bf16.msra.mxu0 %v538
    %1336 = vmatprep.subr.bf16.mxu0 %v535
    %1337 = vmatpush1.bf16.msra.mxu0 %v534
    %1338 = vmatprep.subr.bf16.mxu0 %v531
    %1339 = vmatpush1.bf16.msra.mxu0 %v530
    %1340 = vmatprep.subr.bf16.mxu0 %v527
    %1341 = vmatpush1.bf16.msra.mxu0 %v526
    %1342 = vmatprep.subr.bf16.mxu0 %v523
    %1343 = vmatpush1.bf16.msra.mxu0 %v522
    %1344 = vmatprep.subr.bf16.mxu0 %v519
    %1345 = vmatpush1.bf16.msra.mxu0 %v518
    %1346 = vmatprep.subr.bf16.mxu0 %v579
    %1347 = vmatpush2.bf16.msra.mxu0 %v578
    %1348 = vmatprep.subr.bf16.mxu0 %v575
    %1349 = vmatpush2.bf16.msra.mxu0 %v574
    %1350 = vmatprep.subr.bf16.mxu0 %v571
    %1351 = vmatpush2.bf16.msra.mxu0 %v570
    %1352 = vmatprep.subr.bf16.mxu0 %v567
    %1353 = vmatpush2.bf16.msra.mxu0 %v566
    %1354 = vmatprep.subr.bf16.mxu0 %v563
    %1355 = vmatpush2.bf16.msra.mxu0 %v562
    %1356 = vmatprep.subr.bf16.mxu0 %v559
    %1357 = vmatpush2.bf16.msra.mxu0 %v558
    %1358 = vmatprep.subr.bf16.mxu0 %v555
    %1359 = vmatpush2.bf16.msra.mxu0 %v554
    %1360 = vmatprep.subr.bf16.mxu0 %v551
    %1361 = vmatpush2.bf16.msra.mxu0 %v550
    %1362 = vmatprep.mubr.bf16.mxu0 %v121
    %1363 = vmatmul.mubr.bf16.gmra.mxu0 %v120
    %v1364 = vpop.f32.mrf.mxu0
    %v1365 = vadd.f32 %v1322, %v1364
    %v1366 = vpop.f32.mrf.mxu0
    %v1367 = vadd.f32 %v1324, %v1366
    %v1368 = vpop.f32.mrf.mxu0
    %v1369 = vadd.f32 %v1326, %v1368
    %v1370 = vpop.f32.mrf.mxu0
    %v1371 = vadd.f32 %v1328, %v1370
    %1372 = vdwg.mxu0
    %1373 = vmatprep.subr.bf16.mxu0 %v611
    %1374 = vmatpush1.bf16.msra.mxu0 %v610
    %1375 = vmatprep.subr.bf16.mxu0 %v607
    %1376 = vmatpush1.bf16.msra.mxu0 %v606
    %1377 = vmatprep.subr.bf16.mxu0 %v603
    %1378 = vmatpush1.bf16.msra.mxu0 %v602
    %1379 = vmatprep.subr.bf16.mxu0 %v599
    %1380 = vmatpush1.bf16.msra.mxu0 %v598
    %1381 = vmatprep.subr.bf16.mxu0 %v595
    %1382 = vmatpush1.bf16.msra.mxu0 %v594
    %1383 = vmatprep.subr.bf16.mxu0 %v591
    %1384 = vmatpush1.bf16.msra.mxu0 %v590
    %1385 = vmatprep.subr.bf16.mxu0 %v587
    %1386 = vmatpush1.bf16.msra.mxu0 %v586
    %1387 = vmatprep.subr.bf16.mxu0 %v583
    %1388 = vmatpush1.bf16.msra.mxu0 %v582
    %1389 = vmatprep.subr.bf16.mxu0 %v643
    %1390 = vmatpush2.bf16.msra.mxu0 %v642
    %1391 = vmatprep.subr.bf16.mxu0 %v639
    %1392 = vmatpush2.bf16.msra.mxu0 %v638
    %1393 = vmatprep.subr.bf16.mxu0 %v635
    %1394 = vmatpush2.bf16.msra.mxu0 %v634
    %1395 = vmatprep.subr.bf16.mxu0 %v631
    %1396 = vmatpush2.bf16.msra.mxu0 %v630
    %1397 = vmatprep.subr.bf16.mxu0 %v627
    %1398 = vmatpush2.bf16.msra.mxu0 %v626
    %1399 = vmatprep.subr.bf16.mxu0 %v623
    %1400 = vmatpush2.bf16.msra.mxu0 %v622
    %1401 = vmatprep.subr.bf16.mxu0 %v619
    %1402 = vmatpush2.bf16.msra.mxu0 %v618
    %1403 = vmatprep.subr.bf16.mxu0 %v615
    %1404 = vmatpush2.bf16.msra.mxu0 %v614
    %1405 = vmatprep.mubr.bf16.mxu0 %v123
    %1406 = vmatmul.mubr.bf16.gmra.mxu0 %v122
    %v1407 = vpop.f32.mrf.mxu0
    %v1408 = vadd.f32 %v1365, %v1407
    %v1409 = vpop.f32.mrf.mxu0
    %v1410 = vadd.f32 %v1367, %v1409
    %v1411 = vpop.f32.mrf.mxu0
    %v1412 = vadd.f32 %v1369, %v1411
    %v1413 = vpop.f32.mrf.mxu0
    %v1414 = vadd.f32 %v1371, %v1413
    %1415 = vdwg.mxu0
    %1416 = vmatprep.subr.bf16.mxu0 %v675
    %1417 = vmatpush1.bf16.msra.mxu0 %v674
    %1418 = vmatprep.subr.bf16.mxu0 %v671
    %1419 = vmatpush1.bf16.msra.mxu0 %v670
    %1420 = vmatprep.subr.bf16.mxu0 %v667
    %1421 = vmatpush1.bf16.msra.mxu0 %v666
    %1422 = vmatprep.subr.bf16.mxu0 %v663
    %1423 = vmatpush1.bf16.msra.mxu0 %v662
    %1424 = vmatprep.subr.bf16.mxu0 %v659
    %1425 = vmatpush1.bf16.msra.mxu0 %v658
    %1426 = vmatprep.subr.bf16.mxu0 %v655
    %1427 = vmatpush1.bf16.msra.mxu0 %v654
    %1428 = vmatprep.subr.bf16.mxu0 %v651
    %1429 = vmatpush1.bf16.msra.mxu0 %v650
    %1430 = vmatprep.subr.bf16.mxu0 %v647
    %1431 = vmatpush1.bf16.msra.mxu0 %v646
    %1432 = vmatprep.subr.bf16.mxu0 %v707
    %1433 = vmatpush2.bf16.msra.mxu0 %v706
    %1434 = vmatprep.subr.bf16.mxu0 %v703
    %1435 = vmatpush2.bf16.msra.mxu0 %v702
    %1436 = vmatprep.subr.bf16.mxu0 %v699
    %1437 = vmatpush2.bf16.msra.mxu0 %v698
    %1438 = vmatprep.subr.bf16.mxu0 %v695
    %1439 = vmatpush2.bf16.msra.mxu0 %v694
    %1440 = vmatprep.subr.bf16.mxu0 %v691
    %1441 = vmatpush2.bf16.msra.mxu0 %v690
    %1442 = vmatprep.subr.bf16.mxu0 %v687
    %1443 = vmatpush2.bf16.msra.mxu0 %v686
    %1444 = vmatprep.subr.bf16.mxu0 %v683
    %1445 = vmatpush2.bf16.msra.mxu0 %v682
    %1446 = vmatprep.subr.bf16.mxu0 %v679
    %1447 = vmatpush2.bf16.msra.mxu0 %v678
    %1448 = vmatprep.mubr.bf16.mxu0 %v125
    %1449 = vmatmul.mubr.bf16.gmra.mxu0 %v124
    %v1450 = vpop.f32.mrf.mxu0
    %v1451 = vadd.f32 %v1408, %v1450
    %v1452 = vpop.f32.mrf.mxu0
    %v1453 = vadd.f32 %v1410, %v1452
    %v1454 = vpop.f32.mrf.mxu0
    %v1455 = vadd.f32 %v1412, %v1454
    %v1456 = vpop.f32.mrf.mxu0
    %v1457 = vadd.f32 %v1414, %v1456
    %1458 = vdwg.mxu0
    %1459 = vmatprep.subr.bf16.mxu0 %v739
    %1460 = vmatpush1.bf16.msra.mxu0 %v738
    %1461 = vmatprep.subr.bf16.mxu0 %v735
    %1462 = vmatpush1.bf16.msra.mxu0 %v734
    %1463 = vmatprep.subr.bf16.mxu0 %v731
    %1464 = vmatpush1.bf16.msra.mxu0 %v730
    %1465 = vmatprep.subr.bf16.mxu0 %v727
    %1466 = vmatpush1.bf16.msra.mxu0 %v726
    %1467 = vmatprep.subr.bf16.mxu0 %v723
    %1468 = vmatpush1.bf16.msra.mxu0 %v722
    %1469 = vmatprep.subr.bf16.mxu0 %v719
    %1470 = vmatpush1.bf16.msra.mxu0 %v718
    %1471 = vmatprep.subr.bf16.mxu0 %v715
    %1472 = vmatpush1.bf16.msra.mxu0 %v714
    %1473 = vmatprep.subr.bf16.mxu0 %v711
    %1474 = vmatpush1.bf16.msra.mxu0 %v710
    %1475 = vmatprep.subr.bf16.mxu0 %v771
    %1476 = vmatpush2.bf16.msra.mxu0 %v770
    %1477 = vmatprep.subr.bf16.mxu0 %v767
    %1478 = vmatpush2.bf16.msra.mxu0 %v766
    %1479 = vmatprep.subr.bf16.mxu0 %v763
    %1480 = vmatpush2.bf16.msra.mxu0 %v762
    %1481 = vmatprep.subr.bf16.mxu0 %v759
    %1482 = vmatpush2.bf16.msra.mxu0 %v758
    %1483 = vmatprep.subr.bf16.mxu0 %v755
    %1484 = vmatpush2.bf16.msra.mxu0 %v754
    %1485 = vmatprep.subr.bf16.mxu0 %v751
    %1486 = vmatpush2.bf16.msra.mxu0 %v750
    %1487 = vmatprep.subr.bf16.mxu0 %v747
    %1488 = vmatpush2.bf16.msra.mxu0 %v746
    %1489 = vmatprep.subr.bf16.mxu0 %v743
    %1490 = vmatpush2.bf16.msra.mxu0 %v742
    %1491 = vmatprep.mubr.bf16.mxu0 %v127
    %1492 = vmatmul.mubr.bf16.gmra.mxu0 %v126
    %v1493 = vpop.f32.mrf.mxu0
    %v1494 = vadd.f32 %v1451, %v1493
    %v1495 = vpop.f32.mrf.mxu0
    %v1496 = vadd.f32 %v1453, %v1495
    %v1497 = vpop.f32.mrf.mxu0
    %v1498 = vadd.f32 %v1455, %v1497
    %v1499 = vpop.f32.mrf.mxu0
    %v1500 = vadd.f32 %v1457, %v1499
    %1501 = vdwg.mxu0
    %1502 = vmatprep.subr.bf16.mxu0 %v803
    %1503 = vmatpush1.bf16.msra.mxu0 %v802
    %1504 = vmatprep.subr.bf16.mxu0 %v799
    %1505 = vmatpush1.bf16.msra.mxu0 %v798
    %1506 = vmatprep.subr.bf16.mxu0 %v795
    %1507 = vmatpush1.bf16.msra.mxu0 %v794
    %1508 = vmatprep.subr.bf16.mxu0 %v791
    %1509 = vmatpush1.bf16.msra.mxu0 %v790
    %1510 = vmatprep.subr.bf16.mxu0 %v787
    %1511 = vmatpush1.bf16.msra.mxu0 %v786
    %1512 = vmatprep.subr.bf16.mxu0 %v783
    %1513 = vmatpush1.bf16.msra.mxu0 %v782
    %1514 = vmatprep.subr.bf16.mxu0 %v779
    %1515 = vmatpush1.bf16.msra.mxu0 %v778
    %1516 = vmatprep.subr.bf16.mxu0 %v775
    %1517 = vmatpush1.bf16.msra.mxu0 %v774
    %1518 = vmatprep.subr.bf16.mxu0 %v835
    %1519 = vmatpush2.bf16.msra.mxu0 %v834
    %1520 = vmatprep.subr.bf16.mxu0 %v831
    %1521 = vmatpush2.bf16.msra.mxu0 %v830
    %1522 = vmatprep.subr.bf16.mxu0 %v827
    %1523 = vmatpush2.bf16.msra.mxu0 %v826
    %1524 = vmatprep.subr.bf16.mxu0 %v823
    %1525 = vmatpush2.bf16.msra.mxu0 %v822
    %1526 = vmatprep.subr.bf16.mxu0 %v819
    %1527 = vmatpush2.bf16.msra.mxu0 %v818
    %1528 = vmatprep.subr.bf16.mxu0 %v815
    %1529 = vmatpush2.bf16.msra.mxu0 %v814
    %1530 = vmatprep.subr.bf16.mxu0 %v811
    %1531 = vmatpush2.bf16.msra.mxu0 %v810
    %1532 = vmatprep.subr.bf16.mxu0 %v807
    %1533 = vmatpush2.bf16.msra.mxu0 %v806
    %1534 = vmatprep.mubr.bf16.mxu0 %v129
    %1535 = vmatmul.mubr.bf16.gmra.mxu0 %v128
    %v1536 = vpop.f32.mrf.mxu0
    %v1537 = vadd.f32 %v1494, %v1536
    %v1538 = vpop.f32.mrf.mxu0
    %v1539 = vadd.f32 %v1496, %v1538
    %v1540 = vpop.f32.mrf.mxu0
    %v1541 = vadd.f32 %v1498, %v1540
    %v1542 = vpop.f32.mrf.mxu0
    %v1543 = vadd.f32 %v1500, %v1542
    %1544 = vdwg.mxu0
    %1545 = vmatprep.subr.bf16.mxu0 %v867
    %1546 = vmatpush1.bf16.msra.mxu0 %v866
    %1547 = vmatprep.subr.bf16.mxu0 %v863
    %1548 = vmatpush1.bf16.msra.mxu0 %v862
    %1549 = vmatprep.subr.bf16.mxu0 %v859
    %1550 = vmatpush1.bf16.msra.mxu0 %v858
    %1551 = vmatprep.subr.bf16.mxu0 %v855
    %1552 = vmatpush1.bf16.msra.mxu0 %v854
    %1553 = vmatprep.subr.bf16.mxu0 %v851
    %1554 = vmatpush1.bf16.msra.mxu0 %v850
    %1555 = vmatprep.subr.bf16.mxu0 %v847
    %1556 = vmatpush1.bf16.msra.mxu0 %v846
    %1557 = vmatprep.subr.bf16.mxu0 %v843
    %1558 = vmatpush1.bf16.msra.mxu0 %v842
    %1559 = vmatprep.subr.bf16.mxu0 %v839
    %1560 = vmatpush1.bf16.msra.mxu0 %v838
    %1561 = vmatprep.subr.bf16.mxu0 %v899
    %1562 = vmatpush2.bf16.msra.mxu0 %v898
    %1563 = vmatprep.subr.bf16.mxu0 %v895
    %1564 = vmatpush2.bf16.msra.mxu0 %v894
    %1565 = vmatprep.subr.bf16.mxu0 %v891
    %1566 = vmatpush2.bf16.msra.mxu0 %v890
    %1567 = vmatprep.subr.bf16.mxu0 %v887
    %1568 = vmatpush2.bf16.msra.mxu0 %v886
    %1569 = vmatprep.subr.bf16.mxu0 %v883
    %1570 = vmatpush2.bf16.msra.mxu0 %v882
    %1571 = vmatprep.subr.bf16.mxu0 %v879
    %1572 = vmatpush2.bf16.msra.mxu0 %v878
    %1573 = vmatprep.subr.bf16.mxu0 %v875
    %1574 = vmatpush2.bf16.msra.mxu0 %v874
    %1575 = vmatprep.subr.bf16.mxu0 %v871
    %1576 = vmatpush2.bf16.msra.mxu0 %v870
    %1577 = vmatprep.mubr.bf16.mxu0 %v131
    %1578 = vmatmul.mubr.bf16.gmra.mxu0 %v130
    %v1579 = vpop.f32.mrf.mxu0
    %v1580 = vadd.f32 %v1537, %v1579
    %v1581 = vpop.f32.mrf.mxu0
    %v1582 = vadd.f32 %v1539, %v1581
    %v1583 = vpop.f32.mrf.mxu0
    %v1584 = vadd.f32 %v1541, %v1583
    %v1585 = vpop.f32.mrf.mxu0
    %v1586 = vadd.f32 %v1543, %v1585
    %1587 = vdwg.mxu0
    %v1588 = vld [vmem:[%s2] sm:$0xf]
    %v1590 = vlaneseq
    %v1591 = vshrl.u32 %v1590, 7
    %v1592 = vsub.s32 0, %v1591
    %v1593 = vrot.slane %v1588, %v1592
    %v1594 = vlaneseq
    %v1595 = vshrl.u32 %v1594, 7
    %v1596 = vsub.s32 1, %v1595
    %v1597 = vrot.slane %v1588, %v1596
    %v1598 = vlaneseq
    %v1599 = vshrl.u32 %v1598, 7
    %v1600 = vsub.s32 2, %v1599
    %v1601 = vrot.slane %v1588, %v1600
    %v1602 = vlaneseq
    %v1603 = vshrl.u32 %v1602, 7
    %v1604 = vsub.s32 3, %v1603
    %v1605 = vrot.slane %v1588, %v1604
    %v1610 = vmul.f32 %v1236, %v1593
    %v1611 = vmul.f32 %v1238, %v1597
    %v1612 = vmul.f32 %v1580, %v1601
    %v1613 = vmul.f32 %v1582, %v1605
    %v1614 = vmul.f32 %v1240, %v1593
    %v1615 = vmul.f32 %v1242, %v1597
    %v1616 = vmul.f32 %v1584, %v1601
    %v1617 = vmul.f32 %v1586, %v1605
    %v1618 = vld [vmem:[%s3] sm:$0xf]
    %v1620 = vlaneseq
    %v1621 = vshrl.u32 %v1620, 7
    %v1622 = vsub.s32 0, %v1621
    %v1623 = vrot.slane %v1618, %v1622
    %v1624 = vlaneseq
    %v1625 = vshrl.u32 %v1624, 7
    %v1626 = vsub.s32 1, %v1625
    %v1627 = vrot.slane %v1618, %v1626
    %v1628 = vlaneseq
    %v1629 = vshrl.u32 %v1628, 7
    %v1630 = vsub.s32 2, %v1629
    %v1631 = vrot.slane %v1618, %v1630
    %v1632 = vlaneseq
    %v1633 = vshrl.u32 %v1632, 7
    %v1634 = vsub.s32 3, %v1633
    %v1635 = vrot.slane %v1618, %v1634
    %v1640 = vadd.f32 %v1610, %v1623
    %v1641 = vadd.f32 %v1611, %v1627
    %v1642 = vadd.f32 %v1612, %v1631
    %v1643 = vadd.f32 %v1613, %v1635
    %v1644 = vadd.f32 %v1614, %v1623
    %v1645 = vadd.f32 %v1615, %v1627
    %v1646 = vadd.f32 %v1616, %v1631
    %v1647 = vadd.f32 %v1617, %v1635
    %v1648 = vmax.f32 %v1640, 0.0
    %v1649 = vmax.f32 %v1641, 0.0
    %v1650 = vmax.f32 %v1642, 0.0
    %v1651 = vmax.f32 %v1643, 0.0
    %v1652 = vmax.f32 %v1644, 0.0
    %v1653 = vmax.f32 %v1645, 0.0
    %v1654 = vmax.f32 %v1646, 0.0
    %v1655 = vmax.f32 %v1647, 0.0
    %v1656 = vpack.c.bf16 %v1652, %v1648
    %v1657 = vpack.c.bf16 %v1653, %v1649
    %v1658 = vpack.c.bf16 %v1654, %v1650
    %v1659 = vpack.c.bf16 %v1655, %v1651
    %v1660 = vld [vmem:[#allocation7] sm:$0xff]
    %v1661 = vld [vmem:[#allocation7 + $0x8] sm:$0xff]
    %v1662 = vld [vmem:[#allocation7 + $0x10] sm:$0xff]
    %v1663 = vld [vmem:[#allocation7 + $0x18] sm:$0xff]
    %v1664 = vld [vmem:[#allocation7 + $0x20] sm:$0xff]
    %v1665 = vld [vmem:[#allocation7 + $0x28] sm:$0xff]
    %v1666 = vld [vmem:[#allocation7 + $0x30] sm:$0xff]
    %v1667 = vld [vmem:[#allocation7 + $0x38] sm:$0xff]
    %v1668 = vld [vmem:[#allocation7 + $0x40] sm:$0xff]
    %v1669 = vld [vmem:[#allocation7 + $0x48] sm:$0xff]
    %v1670 = vld [vmem:[#allocation7 + $0x50] sm:$0xff]
    %v1671 = vld [vmem:[#allocation7 + $0x58] sm:$0xff]
    %v1672 = vld [vmem:[#allocation7 + $0x60] sm:$0xff]
    %v1673 = vld [vmem:[#allocation7 + $0x68] sm:$0xff]
    %v1674 = vld [vmem:[#allocation7 + $0x70] sm:$0xff]
    %v1675 = vld [vmem:[#allocation7 + $0x78] sm:$0xff]
    %v1676 = vld [vmem:[#allocation7 + $0x80] sm:$0xff]
    %v1677 = vld [vmem:[#allocation7 + $0x88] sm:$0xff]
    %v1678 = vld [vmem:[#allocation7 + $0x90] sm:$0xff]
    %v1679 = vld [vmem:[#allocation7 + $0x98] sm:$0xff]
    %v1680 = vld [vmem:[#allocation7 + $0xa0] sm:$0xff]
    %v1681 = vld [vmem:[#allocation7 + $0xa8] sm:$0xff]
    %v1682 = vld [vmem:[#allocation7 + $0xb0] sm:$0xff]
    %v1683 = vld [vmem:[#allocation7 + $0xb8] sm:$0xff]
    %v1684 = vld [vmem:[#allocation7 + $0xc0] sm:$0xff]
    %v1685 = vld [vmem:[#allocation7 + $0xc8] sm:$0xff]
    %v1686 = vld [vmem:[#allocation7 + $0xd0] sm:$0xff]
    %v1687 = vld [vmem:[#allocation7 + $0xd8] sm:$0xff]
    %v1688 = vld [vmem:[#allocation7 + $0xe0] sm:$0xff]
    %v1689 = vld [vmem:[#allocation7 + $0xe8] sm:$0xff]
    %v1690 = vld [vmem:[#allocation7 + $0xf0] sm:$0xff]
    %v1691 = vld [vmem:[#allocation7 + $0xf8] sm:$0xff]
    %v1692 = vunpack.c.l.s8.bf16 %v1660
    %v1693 = vunpack.c.l.s8.bf16 %v1661
    %v1694 = vunpack.c.h.s8.bf16 %v1660
    %v1695 = vunpack.c.h.s8.bf16 %v1661
    %v1696 = vunpack.c.l.s8.bf16 %v1662
    %v1697 = vunpack.c.l.s8.bf16 %v1663
    %v1698 = vunpack.c.h.s8.bf16 %v1662
    %v1699 = vunpack.c.h.s8.bf16 %v1663
    %v1700 = vunpack.c.l.s8.bf16 %v1664
    %v1701 = vunpack.c.l.s8.bf16 %v1665
    %v1702 = vunpack.c.h.s8.bf16 %v1664
    %v1703 = vunpack.c.h.s8.bf16 %v1665
    %v1704 = vunpack.c.l.s8.bf16 %v1666
    %v1705 = vunpack.c.l.s8.bf16 %v1667
    %v1706 = vunpack.c.h.s8.bf16 %v1666
    %v1707 = vunpack.c.h.s8.bf16 %v1667
    %v1708 = vunpack.c.l.s8.bf16 %v1668
    %v1709 = vunpack.c.l.s8.bf16 %v1669
    %v1710 = vunpack.c.h.s8.bf16 %v1668
    %v1711 = vunpack.c.h.s8.bf16 %v1669
    %v1712 = vunpack.c.l.s8.bf16 %v1670
    %v1713 = vunpack.c.l.s8.bf16 %v1671
    %v1714 = vunpack.c.h.s8.bf16 %v1670
    %v1715 = vunpack.c.h.s8.bf16 %v1671
    %v1716 = vunpack.c.l.s8.bf16 %v1672
    %v1717 = vunpack.c.l.s8.bf16 %v1673
    %v1718 = vunpack.c.h.s8.bf16 %v1672
    %v1719 = vunpack.c.h.s8.bf16 %v1673
    %v1720 = vunpack.c.l.s8.bf16 %v1674
    %v1721 = vunpack.c.l.s8.bf16 %v1675
    %v1722 = vunpack.c.h.s8.bf16 %v1674
    %v1723 = vunpack.c.h.s8.bf16 %v1675
    %v1724 = vunpack.c.l.s8.bf16 %v1676
    %v1725 = vunpack.c.l.s8.bf16 %v1677
    %v1726 = vunpack.c.h.s8.bf16 %v1676
    %v1727 = vunpack.c.h.s8.bf16 %v1677
    %v1728 = vunpack.c.l.s8.bf16 %v1678
    %v1729 = vunpack.c.l.s8.bf16 %v1679
    %v1730 = vunpack.c.h.s8.bf16 %v1678
    %v1731 = vunpack.c.h.s8.bf16 %v1679
    %v1732 = vunpack.c.l.s8.bf16 %v1680
    %v1733 = vunpack.c.l.s8.bf16 %v1681
    %v1734 = vunpack.c.h.s8.bf16 %v1680
    %v1735 = vunpack.c.h.s8.bf16 %v1681
    %v1736 = vunpack.c.l.s8.bf16 %v1682
    %v1737 = vunpack.c.l.s8.bf16 %v1683
    %v1738 = vunpack.c.h.s8.bf16 %v1682
    %v1739 = vunpack.c.h.s8.bf16 %v1683
    %v1740 = vunpack.c.l.s8.bf16 %v1684
    %v1741 = vunpack.c.l.s8.bf16 %v1685
    %v1742 = vunpack.c.h.s8.bf16 %v1684
    %v1743 = vunpack.c.h.s8.bf16 %v1685
    %v1744 = vunpack.c.l.s8.bf16 %v1686
    %v1745 = vunpack.c.l.s8.bf16 %v1687
    %v1746 = vunpack.c.h.s8.bf16 %v1686
    %v1747 = vunpack.c.h.s8.bf16 %v1687
    %v1748 = vunpack.c.l.s8.bf16 %v1688
    %v1749 = vunpack.c.l.s8.bf16 %v1689
    %v1750 = vunpack.c.h.s8.bf16 %v1688
    %v1751 = vunpack.c.h.s8.bf16 %v1689
    %v1752 = vunpack.c.l.s8.bf16 %v1690
    %v1753 = vunpack.c.l.s8.bf16 %v1691
    %v1754 = vunpack.c.h.s8.bf16 %v1690
    %v1755 = vunpack.c.h.s8.bf16 %v1691
    %1756 = vmatprep.subr.bf16.mxu0 %v1707
    %1757 = vmatpush1.bf16.msra.mxu0 %v1706
    %1758 = vmatprep.subr.bf16.mxu0 %v1705
    %1759 = vmatpush1.bf16.msra.mxu0 %v1704
    %1760 = vmatprep.subr.bf16.mxu0 %v1703
    %1761 = vmatpush1.bf16.msra.mxu0 %v1702
    %1762 = vmatprep.subr.bf16.mxu0 %v1701
    %1763 = vmatpush1.bf16.msra.mxu0 %v1700
    %1764 = vmatprep.subr.bf16.mxu0 %v1699
    %1765 = vmatpush1.bf16.msra.mxu0 %v1698
    %1766 = vmatprep.subr.bf16.mxu0 %v1697
    %1767 = vmatpush1.bf16.msra.mxu0 %v1696
    %1768 = vmatprep.subr.bf16.mxu0 %v1695
    %1769 = vmatpush1.bf16.msra.mxu0 %v1694
    %1770 = vmatprep.subr.bf16.mxu0 %v1693
    %1771 = vmatpush1.bf16.msra.mxu0 %v1692
    %1772 = vmatprep.subr.bf16.mxu0 %v1723
    %1773 = vmatpush2.bf16.msra.mxu0 %v1722
    %1774 = vmatprep.subr.bf16.mxu0 %v1721
    %1775 = vmatpush2.bf16.msra.mxu0 %v1720
    %1776 = vmatprep.subr.bf16.mxu0 %v1719
    %1777 = vmatpush2.bf16.msra.mxu0 %v1718
    %1778 = vmatprep.subr.bf16.mxu0 %v1717
    %1779 = vmatpush2.bf16.msra.mxu0 %v1716
    %1780 = vmatprep.subr.bf16.mxu0 %v1715
    %1781 = vmatpush2.bf16.msra.mxu0 %v1714
    %1782 = vmatprep.subr.bf16.mxu0 %v1713
    %1783 = vmatpush2.bf16.msra.mxu0 %v1712
    %1784 = vmatprep.subr.bf16.mxu0 %v1711
    %1785 = vmatpush2.bf16.msra.mxu0 %v1710
    %1786 = vmatprep.subr.bf16.mxu0 %v1709
    %1787 = vmatpush2.bf16.msra.mxu0 %v1708
    %1788 = vmatprep.mubr.bf16.mxu0 %v1657
    %1789 = vmatmul.mubr.bf16.gmra.mxu0 %v1656
    %v1790 = vpop.f32.mrf.mxu0
    %v1791 = vadd.f32 0.0, %v1790
    %v1792 = vpop.f32.mrf.mxu0
    %v1793 = vadd.f32 0.0, %v1792
    %v1794 = vpop.f32.mrf.mxu0
    %v1795 = vadd.f32 0.0, %v1794
    %v1796 = vpop.f32.mrf.mxu0
    %v1797 = vadd.f32 0.0, %v1796
    %1798 = vdwg.mxu0
    %1799 = vmatprep.subr.bf16.mxu0 %v1739
    %1800 = vmatpush1.bf16.msra.mxu0 %v1738
    %1801 = vmatprep.subr.bf16.mxu0 %v1737
    %1802 = vmatpush1.bf16.msra.mxu0 %v1736
    %1803 = vmatprep.subr.bf16.mxu0 %v1735
    %1804 = vmatpush1.bf16.msra.mxu0 %v1734
    %1805 = vmatprep.subr.bf16.mxu0 %v1733
    %1806 = vmatpush1.bf16.msra.mxu0 %v1732
    %1807 = vmatprep.subr.bf16.mxu0 %v1731
    %1808 = vmatpush1.bf16.msra.mxu0 %v1730
    %1809 = vmatprep.subr.bf16.mxu0 %v1729
    %1810 = vmatpush1.bf16.msra.mxu0 %v1728
    %1811 = vmatprep.subr.bf16.mxu0 %v1727
    %1812 = vmatpush1.bf16.msra.mxu0 %v1726
    %1813 = vmatprep.subr.bf16.mxu0 %v1725
    %1814 = vmatpush1.bf16.msra.mxu0 %v1724
    %1815 = vmatprep.subr.bf16.mxu0 %v1755
    %1816 = vmatpush2.bf16.msra.mxu0 %v1754
    %1817 = vmatprep.subr.bf16.mxu0 %v1753
    %1818 = vmatpush2.bf16.msra.mxu0 %v1752
    %1819 = vmatprep.subr.bf16.mxu0 %v1751
    %1820 = vmatpush2.bf16.msra.mxu0 %v1750
    %1821 = vmatprep.subr.bf16.mxu0 %v1749
    %1822 = vmatpush2.bf16.msra.mxu0 %v1748
    %1823 = vmatprep.subr.bf16.mxu0 %v1747
    %1824 = vmatpush2.bf16.msra.mxu0 %v1746
    %1825 = vmatprep.subr.bf16.mxu0 %v1745
    %1826 = vmatpush2.bf16.msra.mxu0 %v1744
    %1827 = vmatprep.subr.bf16.mxu0 %v1743
    %1828 = vmatpush2.bf16.msra.mxu0 %v1742
    %1829 = vmatprep.subr.bf16.mxu0 %v1741
    %1830 = vmatpush2.bf16.msra.mxu0 %v1740
    %1831 = vmatprep.mubr.bf16.mxu0 %v1659
    %1832 = vmatmul.mubr.bf16.gmra.mxu0 %v1658
    %v1833 = vpop.f32.mrf.mxu0
    %v1834 = vadd.f32 %v1791, %v1833
    %v1835 = vpop.f32.mrf.mxu0
    %v1836 = vadd.f32 %v1793, %v1835
    %v1837 = vpop.f32.mrf.mxu0
    %v1838 = vadd.f32 %v1795, %v1837
    %v1839 = vpop.f32.mrf.mxu0
    %v1840 = vadd.f32 %v1797, %v1839
    %1841 = vdwg.mxu0
    %v1842 = vld [vmem:[%s5] sm:$0x3]
    %v1844 = vlaneseq
    %v1845 = vshrl.u32 %v1844, 7
    %v1846 = vsub.s32 0, %v1845
    %v1847 = vrot.slane %v1842, %v1846
    %v1848 = vlaneseq
    %v1849 = vshrl.u32 %v1848, 7
    %v1850 = vsub.s32 1, %v1849
    %v1851 = vrot.slane %v1842, %v1850
    %v1854 = vmul.f32 %v1834, %v1847
    %v1855 = vmul.f32 %v1836, %v1851
    %v1856 = vmul.f32 %v1838, %v1847
    %v1857 = vmul.f32 %v1840, %v1851
    %v1858 = vld [vmem:[%s6] sm:$0x3]
    %v1860 = vlaneseq
    %v1861 = vshrl.u32 %v1860, 7
    %v1862 = vsub.s32 0, %v1861
    %v1863 = vrot.slane %v1858, %v1862
    %v1864 = vlaneseq
    %v1865 = vshrl.u32 %v1864, 7
    %v1866 = vsub.s32 1, %v1865
    %v1867 = vrot.slane %v1858, %v1866
    %v1870 = vadd.f32 %v1854, %v1863
    %v1871 = vadd.f32 %v1855, %v1867
    %v1872 = vadd.f32 %v1856, %v1863
    %v1873 = vadd.f32 %v1857, %v1867
    %v1874 = vmax.f32 %v1870, 0.0
    %v1875 = vmax.f32 %v1871, 0.0
    %v1876 = vmax.f32 %v1872, 0.0
    %v1877 = vmax.f32 %v1873, 0.0
    %v1878 = vpack.c.bf16 %v1876, %v1874
    %v1879 = vpack.c.bf16 %v1877, %v1875
    %v1880 = vld [vmem:[%s7] sm:$0xff]
    %v1881 = vld [vmem:[%s7 + $0x8] sm:$0xff]
    %v1882 = vld [vmem:[%s7 + $0x10] sm:$0xff]
    %v1883 = vld [vmem:[%s7 + $0x18] sm:$0xff]
    %v1884 = vld [vmem:[%s7 + $0x20] sm:$0xff]
    %v1885 = vld [vmem:[%s7 + $0x28] sm:$0xff]
    %v1886 = vld [vmem:[%s7 + $0x30] sm:$0xff]
    %v1887 = vld [vmem:[%s7 + $0x38] sm:$0xff]
    %v1888 = vunpack.c.l.s8.bf16 %v1880
    %v1889 = vunpack.c.h.s8.bf16 %v1880
    %v1890 = vunpack.c.l.s8.bf16 %v1881
    %v1891 = vunpack.c.h.s8.bf16 %v1881
    %v1892 = vunpack.c.l.s8.bf16 %v1882
    %v1893 = vunpack.c.h.s8.bf16 %v1882
    %v1894 = vunpack.c.l.s8.bf16 %v1883
    %v1895 = vunpack.c.h.s8.bf16 %v1883
    %v1896 = vunpack.c.l.s8.bf16 %v1884
    %v1897 = vunpack.c.h.s8.bf16 %v1884
    %v1898 = vunpack.c.l.s8.bf16 %v1885
    %v1899 = vunpack.c.h.s8.bf16 %v1885
    %v1900 = vunpack.c.l.s8.bf16 %v1886
    %v1901 = vunpack.c.h.s8.bf16 %v1886
    %v1902 = vunpack.c.l.s8.bf16 %v1887
    %v1903 = vunpack.c.h.s8.bf16 %v1887
    %1904 = vmatprep.subr.bf16.mxu0 0
    %1905 = vmatpush1.bf16.msra.mxu0 %v1895
    %1906 = vmatprep.subr.bf16.mxu0 0
    %1907 = vmatpush1.bf16.msra.mxu0 %v1894
    %1908 = vmatprep.subr.bf16.mxu0 0
    %1909 = vmatpush1.bf16.msra.mxu0 %v1893
    %1910 = vmatprep.subr.bf16.mxu0 0
    %1911 = vmatpush1.bf16.msra.mxu0 %v1892
    %1912 = vmatprep.subr.bf16.mxu0 0
    %1913 = vmatpush1.bf16.msra.mxu0 %v1891
    %1914 = vmatprep.subr.bf16.mxu0 0
    %1915 = vmatpush1.bf16.msra.mxu0 %v1890
    %1916 = vmatprep.subr.bf16.mxu0 0
    %1917 = vmatpush1.bf16.msra.mxu0 %v1889
    %1918 = vmatprep.subr.bf16.mxu0 0
    %1919 = vmatpush1.bf16.msra.mxu0 %v1888
    %1920 = vmatprep.subr.bf16.mxu0 0
    %1921 = vmatpush2.bf16.msra.mxu0 %v1903
    %1922 = vmatprep.subr.bf16.mxu0 0
    %1923 = vmatpush2.bf16.msra.mxu0 %v1902
    %1924 = vmatprep.subr.bf16.mxu0 0
    %1925 = vmatpush2.bf16.msra.mxu0 %v1901
    %1926 = vmatprep.subr.bf16.mxu0 0
    %1927 = vmatpush2.bf16.msra.mxu0 %v1900
    %1928 = vmatprep.subr.bf16.mxu0 0
    %1929 = vmatpush2.bf16.msra.mxu0 %v1899
    %1930 = vmatprep.subr.bf16.mxu0 0
    %1931 = vmatpush2.bf16.msra.mxu0 %v1898
    %1932 = vmatprep.subr.bf16.mxu0 0
    %1933 = vmatpush2.bf16.msra.mxu0 %v1897
    %1934 = vmatprep.subr.bf16.mxu0 0
    %1935 = vmatpush2.bf16.msra.mxu0 %v1896
    %1936 = vmatprep.mubr.bf16.mxu0 %v1879
    %1937 = vmatmul.mubr.bf16.gmra.mxu0 %v1878
    %v1938 = vpop.f32.mrf.mxu0
    %v1939 = vadd.f32 0.0, %v1938
    %v1940 = vpop.f32.mrf.mxu0
    %v1941 = vpop.f32.mrf.mxu0
    %v1942 = vadd.f32 0.0, %v1941
    %v1943 = vpop.f32.mrf.mxu0
    %1944 = vdwg.mxu0
    %v1945 = vld [vmem:[%s8] sm:$0x1]
    %v1947 = vlaneseq
    %v1948 = vshrl.u32 %v1947, 7
    %v1949 = vsub.s32 0, %v1948
    %v1950 = vrot.slane %v1945, %v1949
    %v1952 = vmul.f32 %v1939, %v1950
    %v1953 = vmul.f32 %v1942, %v1950
    %v1954 = vld [vmem:[%s9] sm:$0x1]
    %v1956 = vlaneseq
    %v1957 = vshrl.u32 %v1956, 7
    %v1958 = vsub.s32 0, %v1957
    %v1959 = vrot.slane %v1954, %v1958
    %v1961 = vadd.f32 %v1952, %v1959
    %v1962 = vadd.f32 %v1953, %v1959
    %v1963 = vmax.f32 %v1961, 0.0
    %v1964 = vmax.f32 %v1962, 0.0
    %v1965 = vpack.c.bf16 %v1964, %v1963
    %v1966 = vld [vmem:[%s10] sm:$0x1]
    %s1967 = sld [smem:[#allocation2]]
    %v1968 = vstv %s1967
    %vm1969 = vcmask 523264
    %v1971 = vsel %vm1969, %v1966, 0
    %v1974 = vsel %vm1969, %v1965, 0
    %1976 = vmatprep.subr.bf16.mxu0 0
    %1977 = vmatpush1.bf16.xpose.msra.mxu0 0
    %1978 = vmatprep.subr.bf16.mxu0 0
    %1979 = vmatpush1.bf16.xpose.msra.mxu0 0
    %1980 = vmatprep.subr.bf16.mxu0 0
    %1981 = vmatpush1.bf16.xpose.msra.mxu0 0
    %1982 = vmatprep.subr.bf16.mxu0 0
    %1983 = vmatpush1.bf16.xpose.msra.mxu0 0
    %1984 = vmatprep.subr.bf16.mxu0 0
    %1985 = vmatpush1.bf16.xpose.msra.mxu0 0
    %1986 = vmatprep.subr.bf16.mxu0 0
    %1987 = vmatpush1.bf16.xpose.msra.mxu0 0
    %1988 = vmatprep.subr.bf16.mxu0 0
    %1989 = vmatpush1.bf16.xpose.msra.mxu0 0
    %1990 = vmatprep.subr.bf16.mxu0 0
    %1991 = vmatpush1.bf16.xpose.msra.mxu0 %v1974
    %1992 = vmatprep.subr.bf16.mxu0 0
    %1993 = vmatpush2.bf16.xpose.msra.mxu0 0
    %1994 = vmatprep.subr.bf16.mxu0 0
    %1995 = vmatpush2.bf16.xpose.msra.mxu0 0
    %1996 = vmatprep.subr.bf16.mxu0 0
    %1997 = vmatpush2.bf16.xpose.msra.mxu0 0
    %1998 = vmatprep.subr.bf16.mxu0 0
    %1999 = vmatpush2.bf16.xpose.msra.mxu0 0
    %2000 = vmatprep.subr.bf16.mxu0 0
    %2001 = vmatpush2.bf16.xpose.msra.mxu0 0
    %2002 = vmatprep.subr.bf16.mxu0 0
    %2003 = vmatpush2.bf16.xpose.msra.mxu0 0
    %2004 = vmatprep.subr.bf16.mxu0 0
    %2005 = vmatpush2.bf16.xpose.msra.mxu0 0
    %2006 = vmatprep.subr.bf16.mxu0 0
    %2007 = vmatpush2.bf16.xpose.msra.mxu0 0
    %2008 = vmatprep.mubr.bf16.mxu0 0
    %2009 = vmatmul.mubr.bf16.gmra.mxu0 %v1971
    %v2010 = vpop.f32.mrf.mxu0
    %v2011 = vadd.f32 %v1968, %v2010
    %v2012 = vpop.f32.mrf.mxu0
    %v2013 = vpop.f32.mrf.mxu0
    %v2014 = vpop.f32.mrf.mxu0
    %2015 = vdwg.mxu0
    %v2016 = vxor.u32 %v2011, 2147483648
    %v2017 = vmul.f32 %v2016, 1.442695
    %v2018 = vpow.pop %v2017
    %v2019 = vadd.f32 %v2018, 1.0
    %v2020 = vrcp.pop %v2019
    %v2021 = vmul.f32 1.0, %v2020
    %vm2022 = vcmask 122880
    %2023 = vst.msk [vmem:[%s12] sm:$0x1] %vm2022, %v2021
    // Predicated region
    $region62: #{weight_score_forward.1} parent=1 // pred_check
      _
    $region63: #{weight_score_forward.1} parent=1 // pred_check_branch
      %2025 = sbr.rel (0) target = $region65
    $region64: #{weight_score_forward.1} parent=1 // pred_region
      _
    $region65: #{weight_score_forward.1} parent=1 // pred_fallthru
      _
    // Predicated region
    $region66: #{weight_score_forward.1} parent=1 // pred_check
      _
    $region67: #{weight_score_forward.1} parent=1 // pred_check_branch
      %2027 = sbr.rel (0) target = $region69
    $region68: #{weight_score_forward.1} parent=1 // pred_region
      _
    $region69: #{weight_score_forward.1} parent=1 // pred_fallthru
      _
    %2028 = vsyncpa [#allocation4], 1
    %2029 = vsyncpa [#allocation6], 1

</llo_original>
